<compile_context>
chip_gen: v5e
topology: v5e:2x2
jax: 0.10.0
libtpu: 0.0.40
codegen_flags: <defaults>
</compile_context>

<pallas_src>
import functools

import jax
import jax.numpy as jnp
from jax import lax
from jax.experimental import pallas as pl
from jax.experimental.pallas import tpu as pltpu

RMS_EPS = 1.1920929e-07   # torch.finfo(torch.float32).eps (F.rms_norm default)
NEG_BIG = -1e30           # finite masked-logit value (avoids -inf NaN hazards)


def _rms_norm(x):
    ms = jnp.mean(x * x, axis=-1, keepdims=True)
    return x * lax.rsqrt(ms + RMS_EPS)


def _digit_mixin_concat_kernel(de_ref, we_ref, wqkv_ref, wp_ref, wfc_de_ref,
                               wfc_we_ref, bfc_ref, cos_ref, sin_ref,
                               pswap_ref, segmean_ref, bias_ref, out_ref,
                               de_scr_ref, *, n_head, length_factor,
                               use_digit_self_attn, b_blk, seq_t, seq_s):
    lf = length_factor
    T, S = seq_t, seq_s
    BT, BS = b_blk * T, b_blk * S
    D = de_ref.shape[-1]
    dh = D // n_head

    if use_digit_self_attn:
        de = de_ref[...].astype(jnp.float32)               # (BT, D)
        scale = 1.0 / (dh ** 0.5)

        # pre-attention RMSNorm (the residual below adds the raw de)
        h = _rms_norm(de).astype(jnp.bfloat16)

        # fused Q/K/V projection on the whole batch block: (BT, D) @ (D, 3D)
        qkv = jnp.dot(h, wqkv_ref[...], preferred_element_type=jnp.float32)
        q, k, v = qkv[:, :D], qkv[:, D:2 * D], qkv[:, 2 * D:]

        # per-head inverse RMS at full width: one segment-mean matmul (MXU)
        segmean = segmean_ref[...]                          # (D, D) bf16

        def head_rms_inv(x):
            ms = jnp.dot((x * x).astype(jnp.bfloat16), segmean,
                         preferred_element_type=jnp.float32)
            return lax.rsqrt(ms + RMS_EPS)

        # full-width RoPE; half-swap is one (D, D) permutation matmul (MXU)
        cosf, sinf = cos_ref[...], sin_ref[...]             # (T, D) fp32
        if b_blk > 1:                                       # tile over rows
            cosf = jnp.concatenate([cosf] * b_blk, axis=0)
            sinf = jnp.concatenate([sinf] * b_blk, axis=0)
        pswap = pswap_ref[...]                              # (D, D) bf16

        def rope(x):
            xs = jnp.dot(x.astype(jnp.bfloat16), pswap,
                         preferred_element_type=jnp.float32)
            return x * cosf + xs * sinf

        qn = rope(q * (head_rms_inv(q) * scale)).astype(jnp.bfloat16)
        kn = rope(k * head_rms_inv(k)).astype(jnp.bfloat16)
        vb = v.astype(jnp.bfloat16)
        bias = bias_ref[...]                                # (T, T) fp32

        # score/softmax/PV per (row, head); head concat folded into wp slices
        attn = jnp.zeros((BT, D), jnp.float32)
        for hd in range(n_head):
            c0, c1 = hd * dh, (hd + 1) * dh
            pv_rows = []
            for b in range(b_blk):
                r0, r1 = b * T, (b + 1) * T
                s = lax.dot_general(
                    qn[r0:r1, c0:c1], kn[r0:r1, c0:c1],
                    dimension_numbers=(((1,), (1,)), ((), ())),
                    preferred_element_type=jnp.float32) + bias
                m = jnp.max(s, axis=-1, keepdims=True)
                p = jnp.exp(s - m)
                p = p * pl.reciprocal(jnp.sum(p, axis=-1, keepdims=True),
                                      approx=True)          # EUP, not VALU
                pv_rows.append(jnp.dot(p.astype(jnp.bfloat16),
                                       vb[r0:r1, c0:c1],
                                       preferred_element_type=jnp.float32))
            pv = pv_rows[0] if b_blk == 1 else jnp.concatenate(pv_rows, axis=0)
            attn = attn + jnp.dot(pv.astype(jnp.bfloat16),
                                  wp_ref[pl.ds(hd * dh, dh), :],
                                  preferred_element_type=jnp.float32)

        de_scr_ref[...] = de + attn                         # residual in fp32
        de_src = de_scr_ref
    else:
        de_src = de_ref                                     # Identity path

    # '(S lf) D -> S (lf D)' + concat + fc, folded into lf accumulating
    # matmuls over strided row views of the staged digit embeddings.
    out = jnp.dot(we_ref[...].astype(jnp.bfloat16), wfc_we_ref[...],
                  preferred_element_type=jnp.float32)
    for j in range(lf):
        dej = de_src[pl.ds(j, BS, stride=lf), :].astype(jnp.bfloat16)
        out = out + jnp.dot(dej, wfc_de_ref[pl.ds(j * D, D), :],
                            preferred_element_type=jnp.float32)
    out = out + bfc_ref[...].astype(jnp.float32)            # (1, Ct) broadcast
    out_ref[...] = out.astype(out_ref.dtype)


def _pick_batch_block(batch, target_steps=4):
    """Largest divisor of `batch` that still leaves >= target_steps grid steps
    (keeps v7x TensorCores with a few steps each for DMA/compute overlap)."""
    for b in range(batch, 0, -1):
        if batch % b == 0 and batch // b >= target_steps:
            return b
    return 1


def digit_mixin_concat(we, de, params, cos, sin, *, n_head, length_factor,
                       use_digit_self_attn, batch_block=None):
    """we: (B, S, Ct) f32; de: (B, S*lf, D) f32.
    params = (wqkv (D,3D), wp (D,D), wfc_de (lf*D,Ct), wfc_we (Ct,Ct)) in bf16
    stored as (in, out), plus b_fc (1, Ct) f32.  cos/sin: (T, head_dim//2)."""
    wqkv, wp, wfc_de, wfc_we, b_fc = params
    B, T, D = de.shape
    _, S, Ct = we.shape
    lf = length_factor
    dh = D // n_head
    assert T == S * lf and D % n_head == 0

    b_blk = _pick_batch_block(B) if batch_block is None else batch_block
    assert B % b_blk == 0
    grid = (B // b_blk,)

    # ---- loop-invariant constants, built once host-side and DMA'd once ----
    # head-tiled RoPE tables with the sign folded into sin:
    #   rope(x) = x * cos_full + (x @ p_swap) * sin_full
    cos_full = jnp.tile(jnp.concatenate([cos, cos], axis=-1), (1, n_head))
    sin_full = jnp.tile(jnp.concatenate([sin, -sin], axis=-1), (1, n_head))
    # (D, D) per-head half-swap permutation (one bf16 MXU matmul in-kernel)
    d = dh // 2
    lane = jnp.arange(D)
    src = (lane // dh) * dh + ((lane % dh) + d) % dh
    p_swap = (lane[:, None] == src[None, :]).astype(jnp.bfloat16)
    # (D, D) per-head segment-mean matrix: per-head mean(x^2) in one matmul
    head_id = lane // dh
    seg_mean = ((head_id[:, None] == head_id[None, :]).astype(jnp.float32)
                / dh).astype(jnp.bfloat16)
    # additive causal bias (finite, fp32)
    r = jnp.arange(T)
    bias = jnp.where(r[None, :] <= r[:, None], 0.0, NEG_BIG).astype(jnp.float32)

    # flatten batch into the sublane (row) dim; free (row-major contiguous)
    de_flat = de.reshape(B * T, D)
    we_flat = we.reshape(B * S, Ct)

    kern = functools.partial(
        _digit_mixin_concat_kernel, n_head=n_head, length_factor=lf,
        use_digit_self_attn=use_digit_self_attn, b_blk=b_blk, seq_t=T, seq_s=S)

    inv = lambda b: (0, 0)          # grid-invariant blocks (weights / tables)
    out_flat = pl.pallas_call(
        kern,
        out_shape=jax.ShapeDtypeStruct((B * S, Ct), we.dtype),
        grid=grid,
        in_specs=[
            pl.BlockSpec((b_blk * T, D), lambda b: (b, 0)),     # de
            pl.BlockSpec((b_blk * S, Ct), lambda b: (b, 0)),    # we
            pl.BlockSpec((D, 3 * D), inv),                      # wqkv
            pl.BlockSpec((D, D), inv),                          # wp
            pl.BlockSpec((lf * D, Ct), inv),                    # wfc_de
            pl.BlockSpec((Ct, Ct), inv),                        # wfc_we
            pl.BlockSpec((1, Ct), inv),                         # b_fc
            pl.BlockSpec((T, D), inv),                          # cos_full
            pl.BlockSpec((T, D), inv),                          # sin_full
            pl.BlockSpec((D, D), inv),                          # p_swap
            pl.BlockSpec((D, D), inv),                          # seg_mean
            pl.BlockSpec((T, T), inv),                          # causal bias
        ],
        out_specs=pl.BlockSpec((b_blk * S, Ct), lambda b: (b, 0)),
        scratch_shapes=[pltpu.VMEM((b_blk * T, D), jnp.float32)],
        compiler_params=pltpu.CompilerParams(
            dimension_semantics=("parallel",)),
        # TODO(synk): at production widths, single-buffer the grid-invariant
        # weight specs / tile over Ct and set vmem_limit_bytes (v7x: 64 MiB).
    )(de_flat, we_flat, wqkv, wp, wfc_de, wfc_we, b_fc,
      cos_full, sin_full, p_swap, seg_mean, bias)
    return out_flat.reshape(B, S, Ct)


def make_rotary_tables(seq_len, head_dim, base=10000.0):
    # Rotary.forward: cos/sin computed in fp32, cached as bf16; the torch
    # multiply re-promotes to fp32, so round through bf16 here to match.
    inv_freq = 1.0 / (base ** (jnp.arange(0, head_dim, 2, dtype=jnp.float32)
                               / head_dim))
    t = jnp.arange(seq_len, dtype=jnp.float32)
    freqs = jnp.outer(t, inv_freq)                         # (T, head_dim//2)
    cos = jnp.cos(freqs).astype(jnp.bfloat16).astype(jnp.float32)
    sin = jnp.sin(freqs).astype(jnp.bfloat16).astype(jnp.float32)
    return cos, sin


# ---------------------------- pure-JAX reference ----------------------------

def _ref_attention(h, wqkv, wp, cos, sin, n_head):
    B, T, D = h.shape
    dh = D // n_head
    d = dh // 2
    qkv = h @ wqkv
    q, k, v = jnp.split(qkv, 3, axis=-1)
    q = _rms_norm(q.reshape(B, T, n_head, dh))
    k = _rms_norm(k.reshape(B, T, n_head, dh))
    v = v.reshape(B, T, n_head, dh)
    cb, sb = cos[None, :, None, :], sin[None, :, None, :]

    def rope(t):
        t1, t2 = t[..., :d], t[..., d:]
        return jnp.concatenate([t1 * cb + t2 * sb, -t1 * sb + t2 * cb], axis=-1)

    q, k = rope(q), rope(k)
    s = jnp.einsum("bthd,bshd->bhts", q, k) / jnp.sqrt(jnp.float32(dh))
    mask = jnp.tril(jnp.ones((T, T), dtype=bool))
    s = jnp.where(mask[None, None], s, -jnp.inf)
    p = jax.nn.softmax(s, axis=-1)
    y = jnp.einsum("bhts,bshd->bthd", p, v).reshape(B, T, D)
    return y @ wp


def _ref_forward(we, de, params_f32, cos, sin, *, n_head, length_factor,
                 use_digit_self_attn):
    wqkv, wp, wfc_de, wfc_we, b_fc = params_f32
    if use_digit_self_attn:
        de = de + _ref_attention(_rms_norm(de), wqkv, wp, cos, sin, n_head)
    B, T, D = de.shape
    S = T // length_factor
    de_r = de.reshape(B, S, length_factor * D)   # 'B (S lf) D -> B S (lf D)'
    return de_r @ wfc_de + we @ wfc_we + b_fc


# ----------------------------------- main -----------------------------------

if __name__ == "__main__":
    S = 8            # token sequence length
    LENGTH_FACTOR = 3
    N_EMBD_TOK = 64
    N_EMBD_DIGIT = 64   # must equal n_embd_tok for the digit self-attention
    N_HEAD = 2
    T = S * LENGTH_FACTOR
    HEAD_DIM = N_EMBD_DIGIT // N_HEAD

    key = jax.random.PRNGKey(0)
    k0, k1, k2, k3, k4, kdata = jax.random.split(key, 6)

    # Weights stored (in, out) so the kernel computes y = x @ W, rounded
    # through bf16 so the bf16-MXU kernel and the fp32 reference see identical
    # values.  NOTE: the PyTorch module zero-inits c_proj.weight (a trainable
    # param); a small random init is used so the attention path is exercised.
    std_a = 1.0 / (N_EMBD_DIGIT ** 0.5)
    fc_in = N_EMBD_TOK + N_EMBD_DIGIT * LENGTH_FACTOR
    std_f = 1.0 / (fc_in ** 0.5)
    wqkv = (std_a * jax.random.normal(k0, (N_EMBD_DIGIT, 3 * N_EMBD_DIGIT),
                                      jnp.float32)).astype(jnp.bfloat16)
    wp = (std_a * jax.random.normal(k1, (N_EMBD_DIGIT, N_EMBD_DIGIT),
                                    jnp.float32)).astype(jnp.bfloat16)
    wfc_de = (std_f * jax.random.normal(
        k2, (LENGTH_FACTOR * N_EMBD_DIGIT, N_EMBD_TOK),
        jnp.float32)).astype(jnp.bfloat16)
    wfc_we = (std_f * jax.random.normal(k3, (N_EMBD_TOK, N_EMBD_TOK),
                                        jnp.float32)).astype(jnp.bfloat16)
    b_fc = std_f * jax.random.normal(k4, (1, N_EMBD_TOK), dtype=jnp.float32)
    params = (wqkv, wp, wfc_de, wfc_we, b_fc)
    params_f32 = tuple(p.astype(jnp.float32) for p in params)

    cos, sin = make_rotary_tables(T, HEAD_DIM)

    # B=2 -> batch block 1 (2 grid steps); B=8 -> batch block 2 (4 grid steps)
    for B in (2, 8):
        kd, kw, kdata = jax.random.split(kdata, 3)
        de = jax.random.normal(kd, (B, T, N_EMBD_DIGIT), dtype=jnp.float32)
        we = jax.random.normal(kw, (B, S, N_EMBD_TOK), dtype=jnp.float32)
        for use_attn in (True, False):   # digit_attn path and Identity path
            out = digit_mixin_concat(
                we, de, params, cos, sin, n_head=N_HEAD,
                length_factor=LENGTH_FACTOR, use_digit_self_attn=use_attn)
            out = jax.block_until_ready(out)
            ref = _ref_forward(
                we, de, params_f32, cos, sin, n_head=N_HEAD,
                length_factor=LENGTH_FACTOR, use_digit_self_attn=use_attn)
            ref = jax.block_until_ready(ref)
            assert out.shape == (B, S, N_EMBD_TOK), out.shape
            err = float(jnp.max(jnp.abs(out - ref)))
            # bf16 MXU inputs (fp32 accumulation) + approx reciprocal ->
            # inference-grade tolerance vs. the pure-fp32 reference.
            assert jnp.allclose(out, ref, atol=3e-2, rtol=3e-2), \
                (B, use_attn, err)

    print("KERNEL_OK")
</pallas_src>

<mosaic_0001>
module attributes {stable_mosaic.version = 11 : i64} {
  func.func @_digit_mixin_concat_kernel(%arg0: i32, %arg1: memref<24x64xf32, #tpu.memory_space<vmem>>, %arg2: memref<8x64xf32, #tpu.memory_space<vmem>>, %arg3: memref<64x192xbf16, #tpu.memory_space<vmem>>, %arg4: memref<64x64xbf16, #tpu.memory_space<vmem>>, %arg5: memref<192x64xbf16, #tpu.memory_space<vmem>>, %arg6: memref<64x64xbf16, #tpu.memory_space<vmem>>, %arg7: memref<1x64xf32, #tpu.memory_space<vmem>>, %arg8: memref<24x64xf32, #tpu.memory_space<vmem>>, %arg9: memref<24x64xf32, #tpu.memory_space<vmem>>, %arg10: memref<64x64xbf16, #tpu.memory_space<vmem>>, %arg11: memref<64x64xbf16, #tpu.memory_space<vmem>>, %arg12: memref<24x24xf32, #tpu.memory_space<vmem>>, %arg13: memref<8x64xf32, #tpu.memory_space<vmem>>, %arg14: memref<24x64xf32, #tpu.memory_space<vmem>>) attributes {dimension_semantics = [#tpu.dimension_semantics<parallel>], iteration_bounds = array<i64: 2>, scalar_prefetch = 0 : i64, scratch_operands = 1 : i64, tpu.core_type = #tpu.core_type<tc>, window_params = [{transform_indices = @transform_0, window_bounds = array<i64: 24, 64>}, {transform_indices = @transform_1, window_bounds = array<i64: 8, 64>}, {pipeline_mode = #tpu.pipeline_mode<synchronous>, transform_indices = @transform_2, window_bounds = array<i64: 64, 192>}, {pipeline_mode = #tpu.pipeline_mode<synchronous>, transform_indices = @transform_3, window_bounds = array<i64: 64, 64>}, {pipeline_mode = #tpu.pipeline_mode<synchronous>, transform_indices = @transform_4, window_bounds = array<i64: 192, 64>}, {pipeline_mode = #tpu.pipeline_mode<synchronous>, transform_indices = @transform_5, window_bounds = array<i64: 64, 64>}, {pipeline_mode = #tpu.pipeline_mode<synchronous>, transform_indices = @transform_6, window_bounds = array<i64: 1, 64>}, {pipeline_mode = #tpu.pipeline_mode<synchronous>, transform_indices = @transform_7, window_bounds = array<i64: 24, 64>}, {pipeline_mode = #tpu.pipeline_mode<synchronous>, transform_indices = @transform_8, window_bounds = array<i64: 24, 64>}, {pipeline_mode = #tpu.pipeline_mode<synchronous>, transform_indices = @transform_9, window_bounds = array<i64: 64, 64>}, {pipeline_mode = #tpu.pipeline_mode<synchronous>, transform_indices = @transform_10, window_bounds = array<i64: 64, 64>}, {pipeline_mode = #tpu.pipeline_mode<synchronous>, transform_indices = @transform_11, window_bounds = array<i64: 24, 24>}, {transform_indices = @transform_12, window_bounds = array<i64: 8, 64>}]} {
    %c0 = arith.constant 0 : index
    %c0_0 = arith.constant 0 : index
    %0 = vector.load %arg1[%c0, %c0_0] : memref<24x64xf32, #tpu.memory_space<vmem>>, vector<24x64xf32>
    %1 = arith.mulf %0, %0 : vector<24x64xf32>
    %cst = arith.constant dense<0.000000e+00> : vector<24xf32>
    %2 = vector.multi_reduction <add>, %1, %cst [1] : vector<24x64xf32> to vector<24xf32>
    %3 = vector.shape_cast %2 : vector<24xf32> to vector<24x1xf32>
    %cst_1 = arith.constant 6.400000e+01 : f32
    %4 = vector.broadcast %cst_1 : f32 to vector<24x1xf32>
    %5 = arith.divf %3, %4 : vector<24x1xf32>
    %cst_2 = arith.constant 1.1920929E-7 : f32
    %6 = vector.broadcast %cst_2 : f32 to vector<24x1xf32>
    %7 = arith.addf %5, %6 : vector<24x1xf32>
    %8 = math.rsqrt %7 : vector<24x1xf32>
    %9 = vector.broadcast %8 : vector<24x1xf32> to vector<24x64xf32>
    %10 = arith.mulf %0, %9 : vector<24x64xf32>
    %11 = arith.truncf %10 : vector<24x64xf32> to vector<24x64xbf16>
    %c0_3 = arith.constant 0 : index
    %c0_4 = arith.constant 0 : index
    %12 = vector.load %arg3[%c0_3, %c0_4] : memref<64x192xbf16, #tpu.memory_space<vmem>>, vector<64x192xbf16>
    %cst_5 = arith.constant dense<0.000000e+00> : vector<24x192xf32>
    %13 = tpu.matmul %11, %12, %cst_5 {dimension_numbers = #tpu.dot_dimension_numbers<[1], [0], [0], [1], [0, 0, 1, 1], [], []>} : vector<24x64xbf16>, vector<64x192xbf16>, vector<24x192xf32> -> vector<24x192xf32>
    %14 = vector.extract_strided_slice %13 {offsets = [0, 0], sizes = [24, 64], strides = [1, 1]} : vector<24x192xf32> to vector<24x64xf32>
    %15 = vector.extract_strided_slice %13 {offsets = [0, 64], sizes = [24, 64], strides = [1, 1]} : vector<24x192xf32> to vector<24x64xf32>
    %16 = vector.extract_strided_slice %13 {offsets = [0, 128], sizes = [24, 64], strides = [1, 1]} : vector<24x192xf32> to vector<24x64xf32>
    %c0_6 = arith.constant 0 : index
    %c0_7 = arith.constant 0 : index
    %17 = vector.load %arg11[%c0_6, %c0_7] : memref<64x64xbf16, #tpu.memory_space<vmem>>, vector<64x64xbf16>
    %c0_8 = arith.constant 0 : index
    %c0_9 = arith.constant 0 : index
    %18 = vector.load %arg8[%c0_8, %c0_9] : memref<24x64xf32, #tpu.memory_space<vmem>>, vector<24x64xf32>
    %c0_10 = arith.constant 0 : index
    %c0_11 = arith.constant 0 : index
    %19 = vector.load %arg9[%c0_10, %c0_11] : memref<24x64xf32, #tpu.memory_space<vmem>>, vector<24x64xf32>
    %c0_12 = arith.constant 0 : index
    %c0_13 = arith.constant 0 : index
    %20 = vector.load %arg10[%c0_12, %c0_13] : memref<64x64xbf16, #tpu.memory_space<vmem>>, vector<64x64xbf16>
    %21 = arith.mulf %14, %14 : vector<24x64xf32>
    %22 = arith.truncf %21 : vector<24x64xf32> to vector<24x64xbf16>
    %cst_14 = arith.constant dense<0.000000e+00> : vector<24x64xf32>
    %23 = tpu.matmul %22, %17, %cst_14 {dimension_numbers = #tpu.dot_dimension_numbers<[1], [0], [0], [1], [0, 0, 1, 1], [], []>} : vector<24x64xbf16>, vector<64x64xbf16>, vector<24x64xf32> -> vector<24x64xf32>
    %cst_15 = arith.constant 1.1920929E-7 : f32
    %24 = vector.broadcast %cst_15 : f32 to vector<24x64xf32>
    %25 = arith.addf %23, %24 : vector<24x64xf32>
    %26 = math.rsqrt %25 : vector<24x64xf32>
    %cst_16 = arith.constant 0.176776692 : f32
    %27 = vector.broadcast %cst_16 : f32 to vector<24x64xf32>
    %28 = arith.mulf %26, %27 : vector<24x64xf32>
    %29 = arith.mulf %14, %28 : vector<24x64xf32>
    %30 = arith.truncf %29 : vector<24x64xf32> to vector<24x64xbf16>
    %cst_17 = arith.constant dense<0.000000e+00> : vector<24x64xf32>
    %31 = tpu.matmul %30, %20, %cst_17 {dimension_numbers = #tpu.dot_dimension_numbers<[1], [0], [0], [1], [0, 0, 1, 1], [], []>} : vector<24x64xbf16>, vector<64x64xbf16>, vector<24x64xf32> -> vector<24x64xf32>
    %32 = arith.mulf %29, %18 : vector<24x64xf32>
    %33 = arith.mulf %31, %19 : vector<24x64xf32>
    %34 = arith.addf %32, %33 : vector<24x64xf32>
    %35 = arith.truncf %34 : vector<24x64xf32> to vector<24x64xbf16>
    %36 = arith.mulf %15, %15 : vector<24x64xf32>
    %37 = arith.truncf %36 : vector<24x64xf32> to vector<24x64xbf16>
    %cst_18 = arith.constant dense<0.000000e+00> : vector<24x64xf32>
    %38 = tpu.matmul %37, %17, %cst_18 {dimension_numbers = #tpu.dot_dimension_numbers<[1], [0], [0], [1], [0, 0, 1, 1], [], []>} : vector<24x64xbf16>, vector<64x64xbf16>, vector<24x64xf32> -> vector<24x64xf32>
    %cst_19 = arith.constant 1.1920929E-7 : f32
    %39 = vector.broadcast %cst_19 : f32 to vector<24x64xf32>
    %40 = arith.addf %38, %39 : vector<24x64xf32>
    %41 = math.rsqrt %40 : vector<24x64xf32>
    %42 = arith.mulf %15, %41 : vector<24x64xf32>
    %43 = arith.truncf %42 : vector<24x64xf32> to vector<24x64xbf16>
    %cst_20 = arith.constant dense<0.000000e+00> : vector<24x64xf32>
    %44 = tpu.matmul %43, %20, %cst_20 {dimension_numbers = #tpu.dot_dimension_numbers<[1], [0], [0], [1], [0, 0, 1, 1], [], []>} : vector<24x64xbf16>, vector<64x64xbf16>, vector<24x64xf32> -> vector<24x64xf32>
    %45 = arith.mulf %42, %18 : vector<24x64xf32>
    %46 = arith.mulf %44, %19 : vector<24x64xf32>
    %47 = arith.addf %45, %46 : vector<24x64xf32>
    %48 = arith.truncf %47 : vector<24x64xf32> to vector<24x64xbf16>
    %49 = arith.truncf %16 : vector<24x64xf32> to vector<24x64xbf16>
    %c0_21 = arith.constant 0 : index
    %c0_22 = arith.constant 0 : index
    %50 = vector.load %arg12[%c0_21, %c0_22] : memref<24x24xf32, #tpu.memory_space<vmem>>, vector<24x24xf32>
    %cst_23 = arith.constant 0.000000e+00 : f32
    %51 = vector.broadcast %cst_23 : f32 to vector<24x64xf32>
    %52 = vector.extract_strided_slice %35 {offsets = [0, 0], sizes = [24, 32], strides = [1, 1]} : vector<24x64xbf16> to vector<24x32xbf16>
    %53 = vector.extract_strided_slice %48 {offsets = [0, 0], sizes = [24, 32], strides = [1, 1]} : vector<24x64xbf16> to vector<24x32xbf16>
    %cst_24 = arith.constant dense<0.000000e+00> : vector<24x24xf32>
    %54 = tpu.matmul %52, %53, %cst_24 {dimension_numbers = #tpu.dot_dimension_numbers<[1], [1], [0], [0], [0, 0, 1, 0], [], []>} : vector<24x32xbf16>, vector<24x32xbf16>, vector<24x24xf32> -> vector<24x24xf32>
    %55 = arith.addf %54, %50 : vector<24x24xf32>
    %cst_25 = arith.constant dense<0xFF800000> : vector<24xf32>
    %56 = vector.multi_reduction <maximumf>, %55, %cst_25 [1] : vector<24x24xf32> to vector<24xf32>
    %57 = vector.shape_cast %56 : vector<24xf32> to vector<24x1xf32>
    %58 = vector.broadcast %57 : vector<24x1xf32> to vector<24x24xf32>
    %59 = arith.subf %55, %58 : vector<24x24xf32>
    %60 = math.exp %59 : vector<24x24xf32>
    %cst_26 = arith.constant dense<0.000000e+00> : vector<24xf32>
    %61 = vector.multi_reduction <add>, %60, %cst_26 [1] : vector<24x24xf32> to vector<24xf32>
    %62 = vector.shape_cast %61 : vector<24xf32> to vector<24x1xf32>
    %63 = tpu.reciprocal %62 {approx = true} : vector<24x1xf32> -> vector<24x1xf32>
    %64 = vector.broadcast %63 : vector<24x1xf32> to vector<24x24xf32>
    %65 = arith.mulf %60, %64 : vector<24x24xf32>
    %66 = arith.truncf %65 : vector<24x24xf32> to vector<24x24xbf16>
    %67 = vector.extract_strided_slice %49 {offsets = [0, 0], sizes = [24, 32], strides = [1, 1]} : vector<24x64xbf16> to vector<24x32xbf16>
    %cst_27 = arith.constant dense<0.000000e+00> : vector<24x32xf32>
    %68 = tpu.matmul %66, %67, %cst_27 {dimension_numbers = #tpu.dot_dimension_numbers<[1], [0], [0], [1], [0, 0, 1, 1], [], []>} : vector<24x24xbf16>, vector<24x32xbf16>, vector<24x32xf32> -> vector<24x32xf32>
    %69 = arith.truncf %68 : vector<24x32xf32> to vector<24x32xbf16>
    %c0_28 = arith.constant 0 : index
    %c0_29 = arith.constant 0 : index
    %70 = vector.load %arg4[%c0_28, %c0_29] : memref<64x64xbf16, #tpu.memory_space<vmem>>, vector<32x64xbf16>
    %cst_30 = arith.constant dense<0.000000e+00> : vector<24x64xf32>
    %71 = tpu.matmul %69, %70, %cst_30 {dimension_numbers = #tpu.dot_dimension_numbers<[1], [0], [0], [1], [0, 0, 1, 1], [], []>} : vector<24x32xbf16>, vector<32x64xbf16>, vector<24x64xf32> -> vector<24x64xf32>
    %72 = arith.addf %51, %71 : vector<24x64xf32>
    %73 = vector.extract_strided_slice %35 {offsets = [0, 32], sizes = [24, 32], strides = [1, 1]} : vector<24x64xbf16> to vector<24x32xbf16>
    %74 = vector.extract_strided_slice %48 {offsets = [0, 32], sizes = [24, 32], strides = [1, 1]} : vector<24x64xbf16> to vector<24x32xbf16>
    %cst_31 = arith.constant dense<0.000000e+00> : vector<24x24xf32>
    %75 = tpu.matmul %73, %74, %cst_31 {dimension_numbers = #tpu.dot_dimension_numbers<[1], [1], [0], [0], [0, 0, 1, 0], [], []>} : vector<24x32xbf16>, vector<24x32xbf16>, vector<24x24xf32> -> vector<24x24xf32>
    %76 = arith.addf %75, %50 : vector<24x24xf32>
    %cst_32 = arith.constant dense<0xFF800000> : vector<24xf32>
    %77 = vector.multi_reduction <maximumf>, %76, %cst_32 [1] : vector<24x24xf32> to vector<24xf32>
    %78 = vector.shape_cast %77 : vector<24xf32> to vector<24x1xf32>
    %79 = vector.broadcast %78 : vector<24x1xf32> to vector<24x24xf32>
    %80 = arith.subf %76, %79 : vector<24x24xf32>
    %81 = math.exp %80 : vector<24x24xf32>
    %cst_33 = arith.constant dense<0.000000e+00> : vector<24xf32>
    %82 = vector.multi_reduction <add>, %81, %cst_33 [1] : vector<24x24xf32> to vector<24xf32>
    %83 = vector.shape_cast %82 : vector<24xf32> to vector<24x1xf32>
    %84 = tpu.reciprocal %83 {approx = true} : vector<24x1xf32> -> vector<24x1xf32>
    %85 = vector.broadcast %84 : vector<24x1xf32> to vector<24x24xf32>
    %86 = arith.mulf %81, %85 : vector<24x24xf32>
    %87 = arith.truncf %86 : vector<24x24xf32> to vector<24x24xbf16>
    %88 = vector.extract_strided_slice %49 {offsets = [0, 32], sizes = [24, 32], strides = [1, 1]} : vector<24x64xbf16> to vector<24x32xbf16>
    %cst_34 = arith.constant dense<0.000000e+00> : vector<24x32xf32>
    %89 = tpu.matmul %87, %88, %cst_34 {dimension_numbers = #tpu.dot_dimension_numbers<[1], [0], [0], [1], [0, 0, 1, 1], [], []>} : vector<24x24xbf16>, vector<24x32xbf16>, vector<24x32xf32> -> vector<24x32xf32>
    %90 = arith.truncf %89 : vector<24x32xf32> to vector<24x32xbf16>
    %c32 = arith.constant 32 : index
    %c0_35 = arith.constant 0 : index
    %91 = vector.load %arg4[%c32, %c0_35] : memref<64x64xbf16, #tpu.memory_space<vmem>>, vector<32x64xbf16>
    %cst_36 = arith.constant dense<0.000000e+00> : vector<24x64xf32>
    %92 = tpu.matmul %90, %91, %cst_36 {dimension_numbers = #tpu.dot_dimension_numbers<[1], [0], [0], [1], [0, 0, 1, 1], [], []>} : vector<24x32xbf16>, vector<32x64xbf16>, vector<24x64xf32> -> vector<24x64xf32>
    %93 = arith.addf %72, %92 : vector<24x64xf32>
    %94 = arith.addf %0, %93 : vector<24x64xf32>
    %c0_37 = arith.constant 0 : index
    %c0_38 = arith.constant 0 : index
    %95 = vector.load %arg14[%c0_37, %c0_38] : memref<24x64xf32, #tpu.memory_space<vmem>>, vector<24x64xf32>
    tpu.vector_store %arg14[%c0_37, %c0_38], %94 {strides = array<i32>} : memref<24x64xf32, #tpu.memory_space<vmem>>, vector<24x64xf32>,
    %c0_39 = arith.constant 0 : index
    %c0_40 = arith.constant 0 : index
    %96 = vector.load %arg2[%c0_39, %c0_40] : memref<8x64xf32, #tpu.memory_space<vmem>>, vector<8x64xf32>
    %97 = arith.truncf %96 : vector<8x64xf32> to vector<8x64xbf16>
    %c0_41 = arith.constant 0 : index
    %c0_42 = arith.constant 0 : index
    %98 = vector.load %arg6[%c0_41, %c0_42] : memref<64x64xbf16, #tpu.memory_space<vmem>>, vector<64x64xbf16>
    %cst_43 = arith.constant dense<0.000000e+00> : vector<8x64xf32>
    %99 = tpu.matmul %97, %98, %cst_43 {dimension_numbers = #tpu.dot_dimension_numbers<[1], [0], [0], [1], [0, 0, 1, 1], [], []>} : vector<8x64xbf16>, vector<64x64xbf16>, vector<8x64xf32> -> vector<8x64xf32>
    %c0_44 = arith.constant 0 : index
    %c0_45 = arith.constant 0 : index
    %100 = tpu.strided_load %arg14[%c0_44, %c0_45] {strides = array<i32: 3, 1>} : memref<24x64xf32, #tpu.memory_space<vmem>>, vector<8x64xf32>
    %101 = arith.truncf %100 : vector<8x64xf32> to vector<8x64xbf16>
    %c0_46 = arith.constant 0 : index
    %c0_47 = arith.constant 0 : index
    %102 = vector.load %arg5[%c0_46, %c0_47] : memref<192x64xbf16, #tpu.memory_space<vmem>>, vector<64x64xbf16>
    %cst_48 = arith.constant dense<0.000000e+00> : vector<8x64xf32>
    %103 = tpu.matmul %101, %102, %cst_48 {dimension_numbers = #tpu.dot_dimension_numbers<[1], [0], [0], [1], [0, 0, 1, 1], [], []>} : vector<8x64xbf16>, vector<64x64xbf16>, vector<8x64xf32> -> vector<8x64xf32>
    %104 = arith.addf %99, %103 : vector<8x64xf32>
    %c1 = arith.constant 1 : index
    %c0_49 = arith.constant 0 : index
    %105 = tpu.strided_load %arg14[%c1, %c0_49] {strides = array<i32: 3, 1>} : memref<24x64xf32, #tpu.memory_space<vmem>>, vector<8x64xf32>
    %106 = arith.truncf %105 : vector<8x64xf32> to vector<8x64xbf16>
    %c64 = arith.constant 64 : index
    %c0_50 = arith.constant 0 : index
    %107 = vector.load %arg5[%c64, %c0_50] : memref<192x64xbf16, #tpu.memory_space<vmem>>, vector<64x64xbf16>
    %cst_51 = arith.constant dense<0.000000e+00> : vector<8x64xf32>
    %108 = tpu.matmul %106, %107, %cst_51 {dimension_numbers = #tpu.dot_dimension_numbers<[1], [0], [0], [1], [0, 0, 1, 1], [], []>} : vector<8x64xbf16>, vector<64x64xbf16>, vector<8x64xf32> -> vector<8x64xf32>
    %109 = arith.addf %104, %108 : vector<8x64xf32>
    %c2 = arith.constant 2 : index
    %c0_52 = arith.constant 0 : index
    %110 = tpu.strided_load %arg14[%c2, %c0_52] {strides = array<i32: 3, 1>} : memref<24x64xf32, #tpu.memory_space<vmem>>, vector<8x64xf32>
    %111 = arith.truncf %110 : vector<8x64xf32> to vector<8x64xbf16>
    %c128 = arith.constant 128 : index
    %c0_53 = arith.constant 0 : index
    %112 = vector.load %arg5[%c128, %c0_53] : memref<192x64xbf16, #tpu.memory_space<vmem>>, vector<64x64xbf16>
    %cst_54 = arith.constant dense<0.000000e+00> : vector<8x64xf32>
    %113 = tpu.matmul %111, %112, %cst_54 {dimension_numbers = #tpu.dot_dimension_numbers<[1], [0], [0], [1], [0, 0, 1, 1], [], []>} : vector<8x64xbf16>, vector<64x64xbf16>, vector<8x64xf32> -> vector<8x64xf32>
    %114 = arith.addf %109, %113 : vector<8x64xf32>
    %c0_55 = arith.constant 0 : index
    %c0_56 = arith.constant 0 : index
    %115 = vector.load %arg7[%c0_55, %c0_56] : memref<1x64xf32, #tpu.memory_space<vmem>>, vector<1x64xf32>
    %116 = vector.broadcast %115 : vector<1x64xf32> to vector<8x64xf32>
    %117 = arith.addf %114, %116 : vector<8x64xf32>
    %c0_57 = arith.constant 0 : index
    %c0_58 = arith.constant 0 : index
    %118 = vector.load %arg13[%c0_57, %c0_58] : memref<8x64xf32, #tpu.memory_space<vmem>>, vector<8x64xf32>
    tpu.vector_store %arg13[%c0_57, %c0_58], %117 {strides = array<i32>} : memref<8x64xf32, #tpu.memory_space<vmem>>, vector<8x64xf32>,
    return
  }
  func.func @transform_0(%arg0: i32) -> (i32, i32) {
    %c0_i32 = arith.constant 0 : i32
    %c0_i32_0 = arith.constant 0 : i32
    return %arg0, %c0_i32 : i32, i32
  }
  func.func @transform_1(%arg0: i32) -> (i32, i32) {
    %c0_i32 = arith.constant 0 : i32
    %c0_i32_0 = arith.constant 0 : i32
    return %arg0, %c0_i32 : i32, i32
  }
  func.func @transform_2(%arg0: i32) -> (i32, i32) {
    %c0_i32 = arith.constant 0 : i32
    %c0_i32_0 = arith.constant 0 : i32
    %c0_i32_1 = arith.constant 0 : i32
    return %c0_i32, %c0_i32_0 : i32, i32
  }
  func.func @transform_3(%arg0: i32) -> (i32, i32) {
    %c0_i32 = arith.constant 0 : i32
    %c0_i32_0 = arith.constant 0 : i32
    %c0_i32_1 = arith.constant 0 : i32
    return %c0_i32, %c0_i32_0 : i32, i32
  }
  func.func @transform_4(%arg0: i32) -> (i32, i32) {
    %c0_i32 = arith.constant 0 : i32
    %c0_i32_0 = arith.constant 0 : i32
    %c0_i32_1 = arith.constant 0 : i32
    return %c0_i32, %c0_i32_0 : i32, i32
  }
  func.func @transform_5(%arg0: i32) -> (i32, i32) {
    %c0_i32 = arith.constant 0 : i32
    %c0_i32_0 = arith.constant 0 : i32
    %c0_i32_1 = arith.constant 0 : i32
    return %c0_i32, %c0_i32_0 : i32, i32
  }
  func.func @transform_6(%arg0: i32) -> (i32, i32) {
    %c0_i32 = arith.constant 0 : i32
    %c0_i32_0 = arith.constant 0 : i32
    %c0_i32_1 = arith.constant 0 : i32
    return %c0_i32, %c0_i32_0 : i32, i32
  }
  func.func @transform_7(%arg0: i32) -> (i32, i32) {
    %c0_i32 = arith.constant 0 : i32
    %c0_i32_0 = arith.constant 0 : i32
    %c0_i32_1 = arith.constant 0 : i32
    return %c0_i32, %c0_i32_0 : i32, i32
  }
  func.func @transform_8(%arg0: i32) -> (i32, i32) {
    %c0_i32 = arith.constant 0 : i32
    %c0_i32_0 = arith.constant 0 : i32
    %c0_i32_1 = arith.constant 0 : i32
    return %c0_i32, %c0_i32_0 : i32, i32
  }
  func.func @transform_9(%arg0: i32) -> (i32, i32) {
    %c0_i32 = arith.constant 0 : i32
    %c0_i32_0 = arith.constant 0 : i32
    %c0_i32_1 = arith.constant 0 : i32
    return %c0_i32, %c0_i32_0 : i32, i32
  }
  func.func @transform_10(%arg0: i32) -> (i32, i32) {
    %c0_i32 = arith.constant 0 : i32
    %c0_i32_0 = arith.constant 0 : i32
    %c0_i32_1 = arith.constant 0 : i32
    return %c0_i32, %c0_i32_0 : i32, i32
  }
  func.func @transform_11(%arg0: i32) -> (i32, i32) {
    %c0_i32 = arith.constant 0 : i32
    %c0_i32_0 = arith.constant 0 : i32
    %c0_i32_1 = arith.constant 0 : i32
    return %c0_i32, %c0_i32_0 : i32, i32
  }
  func.func @transform_12(%arg0: i32) -> (i32, i32) {
    %c0_i32 = arith.constant 0 : i32
    %c0_i32_0 = arith.constant 0 : i32
    return %arg0, %c0_i32 : i32, i32
  }
}

</mosaic_0001>

<llo_original>
// kernel: tpu_custom_call.1
$region0: #{tpu_custom_call.1}
  #allocation0 [shape = 'u32[]', space=smem, size = 0x4, offset = 0x4, fixed_abs, tag = 'smem constant byte address 0x4 - core index']
  #allocation1 [shape = 'u32[72,128]{1,0:T(1,128)}', space=vmem, size = 0x9000, scoped, tag = 'internal scratch']
  #allocation2 [shape = 'f32[24,64]{1,0:T(8,128)}', space=vmem, size = 0x3000, scoped, tag = 'scratch operand']
  %s0 = inlined_call_operand.vmem [shape: f32[48,64], index: 0, kind: input, shape index: {}]
  %s1 = inlined_call_operand.hbm [shape: f32[16,64], index: 1, kind: input, shape index: {}]
  %s2 = inlined_call_operand.vmem [shape: bf16[64,192], index: 2, kind: input, shape index: {}]
  %s3 = inlined_call_operand.vmem [shape: bf16[64,64], index: 3, kind: input, shape index: {}]
  %s4 = inlined_call_operand.vmem [shape: bf16[192,64], index: 4, kind: input, shape index: {}]
  %s5 = inlined_call_operand.hbm [shape: bf16[64,64], index: 5, kind: input, shape index: {}]
  %s6 = inlined_call_operand.vmem [shape: f32[1,64], index: 6, kind: input, shape index: {}]
  %s7 = inlined_call_operand.hbm [shape: f32[24,64], index: 7, kind: input, shape index: {}]
  %s8 = inlined_call_operand.hbm [shape: f32[24,64], index: 8, kind: input, shape index: {}]
  %s9 = inlined_call_operand.hbm [shape: bf16[64,64], index: 9, kind: input, shape index: {}]
  %s10 = inlined_call_operand.hbm [shape: bf16[64,64], index: 10, kind: input, shape index: {}]
  %s11 = inlined_call_operand.vmem [shape: f32[24,24], index: 11, kind: input, shape index: {}]
  %s12 = inlined_call_operand.hbm [shape: f32[16,64], index: 12, kind: output, shape index: {}]
  %s13 = sld [smem:[#allocation0]]
  $region105: #{tpu_custom_call.1} parent=0
    _
  %s15 = ssub.s32 1, %s13
  %s16 = scalar_select 0, %s15, %s13
  $region1: #{tpu_custom_call.1} parent=0
    #allocation3 [shape = 'u8[8192]{0}', space=vmem, size = 0x2000, scoped, tag = 'input window, operand 1']
    #allocation4 [shape = 's32[2]{0}', space=sflag, size = 0x8, scoped, tag = 'scoped memory for tpu_custom_call.1']
    #allocation5 [shape = 's32[2]{0}', space=sflag, size = 0x8, scoped, tag = 'scoped memory for tpu_custom_call.1']
    #allocation6 [shape = 'u8[16384]{0}', space=vmem, size = 0x4000, scoped, tag = 'input window, operand 5, single buffered']
    #allocation7 [shape = 's32[1]{0}', space=sflag, size = 0x4, scoped, tag = 'scoped memory for tpu_custom_call.1']
    #allocation8 [shape = 'u8[12288]{0}', space=vmem, size = 0x3000, scoped, tag = 'input window, operand 7, single buffered']
    #allocation9 [shape = 'u8[12288]{0}', space=vmem, size = 0x3000, scoped, tag = 'input window, operand 8, single buffered']
    #allocation10 [shape = 's32[1]{0}', space=sflag, size = 0x4, scoped, tag = 'scoped memory for tpu_custom_call.1']
    #allocation11 [shape = 'u8[16384]{0}', space=vmem, size = 0x4000, scoped, tag = 'input window, operand 9, single buffered']
    #allocation12 [shape = 'u8[16384]{0}', space=vmem, size = 0x4000, scoped, tag = 'input window, operand 10, single buffered']
    #allocation13 [shape = 's32[1]{0}', space=sflag, size = 0x4, scoped, tag = 'scoped memory for tpu_custom_call.1']
    #allocation14 [shape = 'u8[8192]{0}', space=vmem, size = 0x2000, scoped, tag = 'output window, operand 0']
    %17 = vsyncpa [#allocation4], 0
    %s18 = scalar_lea.sflag [#allocation4], 1
    %19 = vsyncpa %s18, 0
    %20 = vsyncpa [#allocation7], 0
    %21 = vsyncpa [#allocation10], 0
    %22 = vsyncpa [#allocation13], 0
    %23 = vsyncpa [#allocation5], 0
    %s24 = scalar_lea.sflag [#allocation5], 1
    %25 = vsyncpa %s24, 0
    loop: start=0, step=1, limit=4
    $region2: #{tpu_custom_call.1} parent=1 // loop_pre_header
      _
    $region3: #{tpu_custom_call.1} parent=1 // loop_header
      %s27 = sphi 0, %s31
      %p28 = scmp.ge.s32.totalorder %s27, 4
      %s37 = sphi 0, %s39
      %s40 = sphi 0, %s37
      %s41 = sphi 0, %s40
      %s57 = sphi 0, %s41
      %s63 = sphi 0, %s65
      %s66 = sphi 0, %s63
      %s67 = sphi 0, %s66
      %s83 = sphi 0, %s67
      %s87 = sphi 0, %s87
      %s89 = sphi 0, %s87
      %s90 = sphi 0, %s89
      %s104 = sphi 0, %s90
      %s108 = sphi 0, %s108
      %s110 = sphi 0, %s108
      %s111 = sphi 0, %s110
      %s125 = sphi 0, %s111
      %s129 = sphi 0, %s129
      %s131 = sphi 0, %s129
      %s132 = sphi 0, %s131
      %s146 = sphi 0, %s132
      %s150 = sphi 0, %s150
      %s152 = sphi 0, %s150
      %s153 = sphi 0, %s152
      %s167 = sphi 0, %s153
      %s171 = sphi 0, %s171
      %s173 = sphi 0, %s171
      %s174 = sphi 0, %s173
      %s188 = sphi 0, %s174
      %s192 = sphi 0, %s192
      %s194 = sphi 0, %s192
      %s195 = sphi 0, %s194
      %s209 = sphi 0, %s195
      %s213 = sphi 0, %s213
      %s215 = sphi 0, %s213
      %s216 = sphi 0, %s215
      %s230 = sphi 0, %s216
      %s234 = sphi 0, %s234
      %s236 = sphi 0, %s234
      %s237 = sphi 0, %s236
      %s251 = sphi 0, %s237
      %s255 = sphi 0, %s255
      %s257 = sphi 0, %s255
      %s258 = sphi 0, %s257
      %s272 = sphi 0, %s258
      %s276 = sphi 0, %s276
      %s278 = sphi 0, %s276
      %s279 = sphi 0, %s278
      %s293 = sphi 0, %s279
      %s299 = sphi 0, %s301
      %s302 = sphi 0, %s299
      %s303 = sphi 0, %s302
      %s319 = sphi 0, %s303
    $region4: #{tpu_custom_call.1} parent=1 // loop_header_branch
      %30 = sbr.rel (%p28) target = $region8
    $region5: #{tpu_custom_call.1} parent=1 // loop_body
      %s32 = ssub.s32 %s27, 1
      %s33 = ssub.s32 %s27, 2
      %s34 = sadd.s32 %s27, 1
      %s35 = ssub.s32 %s27, %s34
      %p36 = scmp.eq.s32.totalorder %s35, 0
      %s38 = sadd.s32 %s37, 1
      %s39 = scalar_select %p36, %s37, %s38
      %p42 = pneg %p36
      %p43 = scmp.eq.s32.totalorder %s27, 1
      %p44 = por %p42, %p43
      %p45 = scmp.ne.s32.totalorder %s37, %s40
      %p46 = scmp.eq.s32.totalorder %s27, 0
      %p47 = por %p45, %p46
      %p48 = scmp.ne.s32.totalorder %s37, %s40
      %p49 = scmp.eq.s32.totalorder %s32, 1
      %p50 = por %p48, %p49
      %p51 = scmp.ne.s32.totalorder %s40, %s41
      %p52 = scmp.eq.s32.totalorder %s32, 0
      %p53 = por %p51, %p52
      %p54 = scmp.ne.s32.totalorder %s40, %s41
      %p55 = scmp.eq.s32.totalorder %s33, 1
      %p56 = por %p54, %p55
      %p58 = scmp.ne.s32.totalorder %s41, %s57
      %p59 = scmp.eq.s32.totalorder %s33, 0
      %p60 = por %p58, %p59
      %s61 = ssub.s32 %s27, %s34
      %p62 = scmp.eq.s32.totalorder %s61, 0
      %s64 = sadd.s32 %s63, 1
      %s65 = scalar_select %p62, %s63, %s64
      %p68 = pneg %p62
      %p69 = scmp.eq.s32.totalorder %s27, 1
      %p70 = por %p68, %p69
      %p71 = scmp.ne.s32.totalorder %s63, %s66
      %p72 = scmp.eq.s32.totalorder %s27, 0
      %p73 = por %p71, %p72
      %p74 = scmp.ne.s32.totalorder %s63, %s66
      %p75 = scmp.eq.s32.totalorder %s32, 1
      %p76 = por %p74, %p75
      %p77 = scmp.ne.s32.totalorder %s66, %s67
      %p78 = scmp.eq.s32.totalorder %s32, 0
      %p79 = por %p77, %p78
      %p80 = scmp.ne.s32.totalorder %s66, %s67
      %p81 = scmp.eq.s32.totalorder %s33, 1
      %p82 = por %p80, %p81
      %p84 = scmp.ne.s32.totalorder %s67, %s83
      %p85 = scmp.eq.s32.totalorder %s33, 0
      %p86 = por %p84, %p85
      %s88 = sadd.s32 %s87, 1
      %p91 = scmp.eq.s32.totalorder %s27, 1
      %p92 = scmp.ne.s32.totalorder %s87, %s89
      %p93 = scmp.eq.s32.totalorder %s27, 0
      %p94 = por %p92, %p93
      %p95 = scmp.ne.s32.totalorder %s87, %s89
      %p96 = scmp.eq.s32.totalorder %s32, 1
      %p97 = por %p95, %p96
      %p98 = scmp.ne.s32.totalorder %s89, %s90
      %p99 = scmp.eq.s32.totalorder %s32, 0
      %p100 = por %p98, %p99
      %p101 = scmp.ne.s32.totalorder %s89, %s90
      %p102 = scmp.eq.s32.totalorder %s33, 1
      %p103 = por %p101, %p102
      %p105 = scmp.ne.s32.totalorder %s90, %s104
      %p106 = scmp.eq.s32.totalorder %s33, 0
      %p107 = por %p105, %p106
      %s109 = sadd.s32 %s108, 1
      %p112 = scmp.eq.s32.totalorder %s27, 1
      %p113 = scmp.ne.s32.totalorder %s108, %s110
      %p114 = scmp.eq.s32.totalorder %s27, 0
      %p115 = por %p113, %p114
      %p116 = scmp.ne.s32.totalorder %s108, %s110
      %p117 = scmp.eq.s32.totalorder %s32, 1
      %p118 = por %p116, %p117
      %p119 = scmp.ne.s32.totalorder %s110, %s111
      %p120 = scmp.eq.s32.totalorder %s32, 0
      %p121 = por %p119, %p120
      %p122 = scmp.ne.s32.totalorder %s110, %s111
      %p123 = scmp.eq.s32.totalorder %s33, 1
      %p124 = por %p122, %p123
      %p126 = scmp.ne.s32.totalorder %s111, %s125
      %p127 = scmp.eq.s32.totalorder %s33, 0
      %p128 = por %p126, %p127
      %s130 = sadd.s32 %s129, 1
      %p133 = scmp.eq.s32.totalorder %s27, 1
      %p134 = scmp.ne.s32.totalorder %s129, %s131
      %p135 = scmp.eq.s32.totalorder %s27, 0
      %p136 = por %p134, %p135
      %p137 = scmp.ne.s32.totalorder %s129, %s131
      %p138 = scmp.eq.s32.totalorder %s32, 1
      %p139 = por %p137, %p138
      %p140 = scmp.ne.s32.totalorder %s131, %s132
      %p141 = scmp.eq.s32.totalorder %s32, 0
      %p142 = por %p140, %p141
      %p143 = scmp.ne.s32.totalorder %s131, %s132
      %p144 = scmp.eq.s32.totalorder %s33, 1
      %p145 = por %p143, %p144
      %p147 = scmp.ne.s32.totalorder %s132, %s146
      %p148 = scmp.eq.s32.totalorder %s33, 0
      %p149 = por %p147, %p148
      %s151 = sadd.s32 %s150, 1
      %p154 = scmp.eq.s32.totalorder %s27, 1
      %p155 = scmp.ne.s32.totalorder %s150, %s152
      %p156 = scmp.eq.s32.totalorder %s27, 0
      %p157 = por %p155, %p156
      %p158 = scmp.ne.s32.totalorder %s150, %s152
      %p159 = scmp.eq.s32.totalorder %s32, 1
      %p160 = por %p158, %p159
      %p161 = scmp.ne.s32.totalorder %s152, %s153
      %p162 = scmp.eq.s32.totalorder %s32, 0
      %p163 = por %p161, %p162
      %p164 = scmp.ne.s32.totalorder %s152, %s153
      %p165 = scmp.eq.s32.totalorder %s33, 1
      %p166 = por %p164, %p165
      %p168 = scmp.ne.s32.totalorder %s153, %s167
      %p169 = scmp.eq.s32.totalorder %s33, 0
      %p170 = por %p168, %p169
      %s172 = sadd.s32 %s171, 1
      %p175 = scmp.eq.s32.totalorder %s27, 1
      %p176 = scmp.ne.s32.totalorder %s171, %s173
      %p177 = scmp.eq.s32.totalorder %s27, 0
      %p178 = por %p176, %p177
      %p179 = scmp.ne.s32.totalorder %s171, %s173
      %p180 = scmp.eq.s32.totalorder %s32, 1
      %p181 = por %p179, %p180
      %p182 = scmp.ne.s32.totalorder %s173, %s174
      %p183 = scmp.eq.s32.totalorder %s32, 0
      %p184 = por %p182, %p183
      %p185 = scmp.ne.s32.totalorder %s173, %s174
      %p186 = scmp.eq.s32.totalorder %s33, 1
      %p187 = por %p185, %p186
      %p189 = scmp.ne.s32.totalorder %s174, %s188
      %p190 = scmp.eq.s32.totalorder %s33, 0
      %p191 = por %p189, %p190
      %s193 = sadd.s32 %s192, 1
      %p196 = scmp.eq.s32.totalorder %s27, 1
      %p197 = scmp.ne.s32.totalorder %s192, %s194
      %p198 = scmp.eq.s32.totalorder %s27, 0
      %p199 = por %p197, %p198
      %p200 = scmp.ne.s32.totalorder %s192, %s194
      %p201 = scmp.eq.s32.totalorder %s32, 1
      %p202 = por %p200, %p201
      %p203 = scmp.ne.s32.totalorder %s194, %s195
      %p204 = scmp.eq.s32.totalorder %s32, 0
      %p205 = por %p203, %p204
      %p206 = scmp.ne.s32.totalorder %s194, %s195
      %p207 = scmp.eq.s32.totalorder %s33, 1
      %p208 = por %p206, %p207
      %p210 = scmp.ne.s32.totalorder %s195, %s209
      %p211 = scmp.eq.s32.totalorder %s33, 0
      %p212 = por %p210, %p211
      %s214 = sadd.s32 %s213, 1
      %p217 = scmp.eq.s32.totalorder %s27, 1
      %p218 = scmp.ne.s32.totalorder %s213, %s215
      %p219 = scmp.eq.s32.totalorder %s27, 0
      %p220 = por %p218, %p219
      %p221 = scmp.ne.s32.totalorder %s213, %s215
      %p222 = scmp.eq.s32.totalorder %s32, 1
      %p223 = por %p221, %p222
      %p224 = scmp.ne.s32.totalorder %s215, %s216
      %p225 = scmp.eq.s32.totalorder %s32, 0
      %p226 = por %p224, %p225
      %p227 = scmp.ne.s32.totalorder %s215, %s216
      %p228 = scmp.eq.s32.totalorder %s33, 1
      %p229 = por %p227, %p228
      %p231 = scmp.ne.s32.totalorder %s216, %s230
      %p232 = scmp.eq.s32.totalorder %s33, 0
      %p233 = por %p231, %p232
      %s235 = sadd.s32 %s234, 1
      %p238 = scmp.eq.s32.totalorder %s27, 1
      %p239 = scmp.ne.s32.totalorder %s234, %s236
      %p240 = scmp.eq.s32.totalorder %s27, 0
      %p241 = por %p239, %p240
      %p242 = scmp.ne.s32.totalorder %s234, %s236
      %p243 = scmp.eq.s32.totalorder %s32, 1
      %p244 = por %p242, %p243
      %p245 = scmp.ne.s32.totalorder %s236, %s237
      %p246 = scmp.eq.s32.totalorder %s32, 0
      %p247 = por %p245, %p246
      %p248 = scmp.ne.s32.totalorder %s236, %s237
      %p249 = scmp.eq.s32.totalorder %s33, 1
      %p250 = por %p248, %p249
      %p252 = scmp.ne.s32.totalorder %s237, %s251
      %p253 = scmp.eq.s32.totalorder %s33, 0
      %p254 = por %p252, %p253
      %s256 = sadd.s32 %s255, 1
      %p259 = scmp.eq.s32.totalorder %s27, 1
      %p260 = scmp.ne.s32.totalorder %s255, %s257
      %p261 = scmp.eq.s32.totalorder %s27, 0
      %p262 = por %p260, %p261
      %p263 = scmp.ne.s32.totalorder %s255, %s257
      %p264 = scmp.eq.s32.totalorder %s32, 1
      %p265 = por %p263, %p264
      %p266 = scmp.ne.s32.totalorder %s257, %s258
      %p267 = scmp.eq.s32.totalorder %s32, 0
      %p268 = por %p266, %p267
      %p269 = scmp.ne.s32.totalorder %s257, %s258
      %p270 = scmp.eq.s32.totalorder %s33, 1
      %p271 = por %p269, %p270
      %p273 = scmp.ne.s32.totalorder %s258, %s272
      %p274 = scmp.eq.s32.totalorder %s33, 0
      %p275 = por %p273, %p274
      %s277 = sadd.s32 %s276, 1
      %p280 = scmp.eq.s32.totalorder %s27, 1
      %p281 = scmp.ne.s32.totalorder %s276, %s278
      %p282 = scmp.eq.s32.totalorder %s27, 0
      %p283 = por %p281, %p282
      %p284 = scmp.ne.s32.totalorder %s276, %s278
      %p285 = scmp.eq.s32.totalorder %s32, 1
      %p286 = por %p284, %p285
      %p287 = scmp.ne.s32.totalorder %s278, %s279
      %p288 = scmp.eq.s32.totalorder %s32, 0
      %p289 = por %p287, %p288
      %p290 = scmp.ne.s32.totalorder %s278, %s279
      %p291 = scmp.eq.s32.totalorder %s33, 1
      %p292 = por %p290, %p291
      %p294 = scmp.ne.s32.totalorder %s279, %s293
      %p295 = scmp.eq.s32.totalorder %s33, 0
      %p296 = por %p294, %p295
      %s297 = ssub.s32 %s27, %s34
      %p298 = scmp.eq.s32.totalorder %s297, 0
      %s300 = sadd.s32 %s299, 1
      %s301 = scalar_select %p298, %s299, %s300
      %p304 = pneg %p298
      %p305 = scmp.eq.s32.totalorder %s27, 1
      %p306 = por %p304, %p305
      %p307 = scmp.ne.s32.totalorder %s299, %s302
      %p308 = scmp.eq.s32.totalorder %s27, 0
      %p309 = por %p307, %p308
      %p310 = scmp.ne.s32.totalorder %s299, %s302
      %p311 = scmp.eq.s32.totalorder %s32, 1
      %p312 = por %p310, %p311
      %p313 = scmp.ne.s32.totalorder %s302, %s303
      %p314 = scmp.eq.s32.totalorder %s32, 0
      %p315 = por %p313, %p314
      %p316 = scmp.ne.s32.totalorder %s302, %s303
      %p317 = scmp.eq.s32.totalorder %s33, 1
      %p318 = por %p316, %p317
      %p320 = scmp.ne.s32.totalorder %s303, %s319
      %p321 = scmp.eq.s32.totalorder %s33, 0
      %p322 = por %p320, %p321
      %p323 = scmp.le.s32.totalorder 1, %s27
      %p324 = scmp.lt.s32.totalorder %s27, 3
      %p325 = pnand %p323, %p324
      %p326 = pneg %p325
      // Predicated region
      $region9: #{tpu_custom_call.1} parent=5 // pred_check
        _
      $region10: #{tpu_custom_call.1} parent=5 // pred_check_branch
        %328 = sbr.rel (%p325) target = $region12
      $region11: #{tpu_custom_call.1} parent=5 // pred_region
        %s329 = ssub.s32 %s27, 1
        // Predicated region
        $region13: #{tpu_custom_call.1} parent=11 // pred_check
          %p330 = pneg %p100
        $region14: #{tpu_custom_call.1} parent=11 // pred_check_branch
          %332 = sbr.rel (%p330) target = $region16
        $region15: #{tpu_custom_call.1} parent=11 // pred_region
          _
        $region16: #{tpu_custom_call.1} parent=11 // pred_fallthru
          _
        // Predicated region
        $region17: #{tpu_custom_call.1} parent=11 // pred_check
          %p333 = pneg %p121
        $region18: #{tpu_custom_call.1} parent=11 // pred_check_branch
          %335 = sbr.rel (%p333) target = $region20
        $region19: #{tpu_custom_call.1} parent=11 // pred_region
          _
        $region20: #{tpu_custom_call.1} parent=11 // pred_fallthru
          _
        // Predicated region
        $region21: #{tpu_custom_call.1} parent=11 // pred_check
          %p336 = pneg %p142
        $region22: #{tpu_custom_call.1} parent=11 // pred_check_branch
          %338 = sbr.rel (%p336) target = $region24
        $region23: #{tpu_custom_call.1} parent=11 // pred_region
          _
        $region24: #{tpu_custom_call.1} parent=11 // pred_fallthru
          _
        // Predicated region
        $region25: #{tpu_custom_call.1} parent=11 // pred_check
          %p339 = pneg %p163
        $region26: #{tpu_custom_call.1} parent=11 // pred_check_branch
          %341 = sbr.rel (%p339) target = $region28
        $region27: #{tpu_custom_call.1} parent=11 // pred_region
          %343 = vsyncadd [#allocation7], 0
          %s344 = sshll.u32 %s5, 4
          %s345 = int_to_ptr.hbm [resolvable:$true] %s344
          %s346 = sshll.u32 [#allocation6], 4
          %s347 = int_to_ptr.vmem [resolvable:$true] %s346
          %352 = dma.hbm_to_vmem [thread:$0]  %s345, 512, %s347, [#allocation7], 64, 64, 4
        $region28: #{tpu_custom_call.1} parent=11 // pred_fallthru
          _
        // Predicated region
        $region29: #{tpu_custom_call.1} parent=11 // pred_check
          %p353 = pneg %p184
        $region30: #{tpu_custom_call.1} parent=11 // pred_check_branch
          %355 = sbr.rel (%p353) target = $region32
        $region31: #{tpu_custom_call.1} parent=11 // pred_region
          _
        $region32: #{tpu_custom_call.1} parent=11 // pred_fallthru
          _
        // Predicated region
        $region33: #{tpu_custom_call.1} parent=11 // pred_check
          %p356 = pneg %p205
        $region34: #{tpu_custom_call.1} parent=11 // pred_check_branch
          %358 = sbr.rel (%p356) target = $region36
        $region35: #{tpu_custom_call.1} parent=11 // pred_region
          %360 = vsyncadd [#allocation7], 0
          %s361 = sshll.u32 %s7, 4
          %s362 = int_to_ptr.hbm [resolvable:$true] %s361
          %s363 = sshll.u32 [#allocation8], 4
          %s364 = int_to_ptr.vmem [resolvable:$true] %s363
          %369 = dma.hbm_to_vmem [thread:$0]  %s362, 384, %s364, [#allocation7], 128, 128, 8
        $region36: #{tpu_custom_call.1} parent=11 // pred_fallthru
          _
        // Predicated region
        $region37: #{tpu_custom_call.1} parent=11 // pred_check
          %p370 = pneg %p226
        $region38: #{tpu_custom_call.1} parent=11 // pred_check_branch
          %372 = sbr.rel (%p370) target = $region40
        $region39: #{tpu_custom_call.1} parent=11 // pred_region
          %374 = vsyncadd [#allocation10], 0
          %s375 = sshll.u32 %s8, 4
          %s376 = int_to_ptr.hbm [resolvable:$true] %s375
          %s377 = sshll.u32 [#allocation9], 4
          %s378 = int_to_ptr.vmem [resolvable:$true] %s377
          %383 = dma.hbm_to_vmem [thread:$0]  %s376, 384, %s378, [#allocation10], 128, 128, 8
        $region40: #{tpu_custom_call.1} parent=11 // pred_fallthru
          _
        // Predicated region
        $region41: #{tpu_custom_call.1} parent=11 // pred_check
          %p384 = pneg %p247
        $region42: #{tpu_custom_call.1} parent=11 // pred_check_branch
          %386 = sbr.rel (%p384) target = $region44
        $region43: #{tpu_custom_call.1} parent=11 // pred_region
          %388 = vsyncadd [#allocation10], 0
          %s389 = sshll.u32 %s9, 4
          %s390 = int_to_ptr.hbm [resolvable:$true] %s389
          %s391 = sshll.u32 [#allocation11], 4
          %s392 = int_to_ptr.vmem [resolvable:$true] %s391
          %397 = dma.hbm_to_vmem [thread:$0]  %s390, 512, %s392, [#allocation10], 64, 64, 4
        $region44: #{tpu_custom_call.1} parent=11 // pred_fallthru
          _
        // Predicated region
        $region45: #{tpu_custom_call.1} parent=11 // pred_check
          %p398 = pneg %p268
        $region46: #{tpu_custom_call.1} parent=11 // pred_check_branch
          %400 = sbr.rel (%p398) target = $region48
        $region47: #{tpu_custom_call.1} parent=11 // pred_region
          %402 = vsyncadd [#allocation13], 0
          %s403 = sshll.u32 %s10, 4
          %s404 = int_to_ptr.hbm [resolvable:$true] %s403
          %s405 = sshll.u32 [#allocation12], 4
          %s406 = int_to_ptr.vmem [resolvable:$true] %s405
          %411 = dma.hbm_to_vmem [thread:$0]  %s404, 512, %s406, [#allocation13], 64, 64, 4
        $region48: #{tpu_custom_call.1} parent=11 // pred_fallthru
          _
        // Predicated region
        $region49: #{tpu_custom_call.1} parent=11 // pred_check
          %p412 = pneg %p289
        $region50: #{tpu_custom_call.1} parent=11 // pred_check_branch
          %414 = sbr.rel (%p412) target = $region52
        $region51: #{tpu_custom_call.1} parent=11 // pred_region
          _
        $region52: #{tpu_custom_call.1} parent=11 // pred_fallthru
          _
      $region12: #{tpu_custom_call.1} parent=5 // pred_fallthru
        _
      %p415 = scmp.lt.s32.totalorder %s27, 2
      // Predicated region
      $region53: #{tpu_custom_call.1} parent=5 // pred_check
        %p416 = pneg %p415
      $region54: #{tpu_custom_call.1} parent=5 // pred_check_branch
        %418 = sbr.rel (%p416) target = $region56
      $region55: #{tpu_custom_call.1} parent=5 // pred_region
        // Predicated region
        $region57: #{tpu_custom_call.1} parent=55 // pred_check
          %p419 = pneg %p47
        $region58: #{tpu_custom_call.1} parent=55 // pred_check_branch
          %421 = sbr.rel (%p419) target = $region60
        $region59: #{tpu_custom_call.1} parent=55 // pred_region
          %s422 = smul.u32 3, %s27
          %p423 = scmp.lt.s32.totalorder %s422, 5
          %s424 = scalar_select %p423, %s422, 5
          %s425 = smul.addr %s424, 8
          %s426 = scalar_lea.vmem %s0, %s425
          %s427 = smul.u32 3, %s27
        $region60: #{tpu_custom_call.1} parent=55 // pred_fallthru
          _
        // Predicated region
        $region61: #{tpu_custom_call.1} parent=55 // pred_check
          %p428 = pneg %p73
        $region62: #{tpu_custom_call.1} parent=55 // pred_check_branch
          %430 = sbr.rel (%p428) target = $region64
        $region63: #{tpu_custom_call.1} parent=55 // pred_region
          %s431 = sand.u32 %s63, 1
          %s432 = scalar_lea.sflag [#allocation4], %s431
          %s433 = sand.u32 %s63, 1
          %s434 = smul.addr %s433, 8
          %s435 = scalar_lea.vmem [#allocation3], %s434
          %437 = vsyncadd %s432, 0
          %s438 = smul.addr %s27, 8
          %s439 = scalar_lea.hbm %s1, %s438
          %s441 = sshll.u32 %s439, 4
          %s442 = int_to_ptr.hbm [resolvable:$true] %s441
          %s443 = sshll.u32 %s435, 4
          %s444 = int_to_ptr.vmem [resolvable:$true] %s443
          %446 = dma.hbm_to_vmem [thread:$0]  %s442, 128, %s444, %s432
        $region64: #{tpu_custom_call.1} parent=55 // pred_fallthru
          _
      $region56: #{tpu_custom_call.1} parent=5 // pred_fallthru
        _
      %p447 = scmp.le.s32.totalorder 1, %s27
      %p448 = scmp.lt.s32.totalorder %s27, 3
      %p449 = pnand %p447, %p448
      %p450 = pneg %p449
      // Predicated region
      $region65: #{tpu_custom_call.1} parent=5 // pred_check
        _
      $region66: #{tpu_custom_call.1} parent=5 // pred_check_branch
        %452 = sbr.rel (%p449) target = $region68
      $region67: #{tpu_custom_call.1} parent=5 // pred_region
        %s453 = ssub.s32 %s27, 1
        %s454 = sand.u32 %s66, 1
        %s455 = scalar_lea.sflag [#allocation4], %s454
        %s456 = sand.u32 %s66, 1
        %s457 = smul.addr %s456, 8
        %s458 = scalar_lea.vmem [#allocation3], %s457
        // Predicated region
        $region69: #{tpu_custom_call.1} parent=67 // pred_check
          %p459 = pneg %p79
        $region70: #{tpu_custom_call.1} parent=67 // pred_check_branch
          %461 = sbr.rel (%p459) target = $region72
        $region71: #{tpu_custom_call.1} parent=67 // pred_region
          %463 = dma.done %s455, 128
        $region72: #{tpu_custom_call.1} parent=67 // pred_fallthru
          _
        // Predicated region
        $region73: #{tpu_custom_call.1} parent=67 // pred_check
          %p464 = pneg %p163
        $region74: #{tpu_custom_call.1} parent=67 // pred_check_branch
          %466 = sbr.rel (%p464) target = $region76
        $region75: #{tpu_custom_call.1} parent=67 // pred_region
          %468 = dma.done [#allocation7], 512
        $region76: #{tpu_custom_call.1} parent=67 // pred_fallthru
          _
        // Predicated region
        $region77: #{tpu_custom_call.1} parent=67 // pred_check
          %p469 = pneg %p205
        $region78: #{tpu_custom_call.1} parent=67 // pred_check_branch
          %471 = sbr.rel (%p469) target = $region80
        $region79: #{tpu_custom_call.1} parent=67 // pred_region
          %473 = dma.done [#allocation7], 384
        $region80: #{tpu_custom_call.1} parent=67 // pred_fallthru
          _
        // Predicated region
        $region81: #{tpu_custom_call.1} parent=67 // pred_check
          %p474 = pneg %p226
        $region82: #{tpu_custom_call.1} parent=67 // pred_check_branch
          %476 = sbr.rel (%p474) target = $region84
        $region83: #{tpu_custom_call.1} parent=67 // pred_region
          %478 = dma.done [#allocation10], 384
        $region84: #{tpu_custom_call.1} parent=67 // pred_fallthru
          _
        // Predicated region
        $region85: #{tpu_custom_call.1} parent=67 // pred_check
          %p479 = pneg %p247
        $region86: #{tpu_custom_call.1} parent=67 // pred_check_branch
          %481 = sbr.rel (%p479) target = $region88
        $region87: #{tpu_custom_call.1} parent=67 // pred_region
          %483 = dma.done [#allocation10], 512
        $region88: #{tpu_custom_call.1} parent=67 // pred_fallthru
          _
        // Predicated region
        $region89: #{tpu_custom_call.1} parent=67 // pred_check
          %p484 = pneg %p268
        $region90: #{tpu_custom_call.1} parent=67 // pred_check_branch
          %486 = sbr.rel (%p484) target = $region92
        $region91: #{tpu_custom_call.1} parent=67 // pred_region
          %488 = dma.done [#allocation13], 512
        $region92: #{tpu_custom_call.1} parent=67 // pred_fallthru
          _
        %s489 = smul.u32 3, %s32
        %p490 = scmp.lt.s32.totalorder %s489, 5
        %s491 = scalar_select %p490, %s489, 5
        %s492 = smul.addr %s491, 8
        %s493 = scalar_lea.vmem %s0, %s492
        %p494 = pneg %p53
        %p495 = pneg %p50
        %s496 = sand.u32 %s66, 1
        %s497 = scalar_lea.sflag [#allocation4], %s496
        %s498 = sand.u32 %s66, 1
        %s499 = smul.addr %s498, 8
        %s500 = scalar_lea.vmem [#allocation3], %s499
        %p501 = pneg %p79
        %p502 = pneg %p76
        %p503 = pneg %p100
        %p504 = pneg %p97
        %p505 = pneg %p121
        %p506 = pneg %p118
        %p507 = pneg %p142
        %p508 = pneg %p139
        %p509 = pneg %p163
        %p510 = pneg %p160
        %p511 = pneg %p184
        %p512 = pneg %p181
        %p513 = pneg %p205
        %p514 = pneg %p202
        %p515 = pneg %p226
        %p516 = pneg %p223
        %p517 = pneg %p247
        %p518 = pneg %p244
        %p519 = pneg %p268
        %p520 = pneg %p265
        %p521 = pneg %p289
        %p522 = pneg %p286
        %p523 = pneg %p315
        %p524 = pneg %p312
        %s525 = sand.u32 %s302, 1
        %s526 = scalar_lea.sflag [#allocation5], %s525
        %s527 = sand.u32 %s302, 1
        %s528 = smul.addr %s527, 8
        %s529 = scalar_lea.vmem [#allocation14], %s528
        %s530 = smul.u32 3, %s32
        %p531 = scmp.lt.s32.totalorder %s530, 5
        %s532 = scalar_select %p531, %s530, 5
        %s533 = smul.addr %s532, 8
        %s534 = scalar_lea.vmem %s0, %s533
        %s535 = smul.u32 3, %s32
        %v537 = vld [vmem:[%s534] sm:$0xff]
        %v538 = vld [vmem:[%s534 + $0x8] sm:$0xff]
        %v539 = vld [vmem:[%s534 + $0x10] sm:$0xff]
        %v540 = vmul.f32 %v537, %v537
        %v541 = vmul.f32 %v538, %v538
        %v542 = vmul.f32 %v539, %v539
        %vm543 = vcmask 523264
        %v544 = vsel %vm543, %v540, 0.0
        %545 = vadd.xlane.f32.xlu0 %v544
        %v546 = vpop.xlane.xlu0 %545
        %v547 = vsel %vm543, %v541, 0.0
        %548 = vadd.xlane.f32.xlu0 %v547
        %v549 = vpop.xlane.xlu0 %548
        %v550 = vsel %vm543, %v542, 0.0
        %551 = vadd.xlane.f32.xlu0 %v550
        %v552 = vpop.xlane.xlu0 %551
        %v553 = vrcp.pop 64.0
        %v554 = vmul.f32 64.0, %v553
        %v555 = vsub.f32 1.0, %v554
        %v556 = vmul.f32 %v553, %v555
        %v557 = vadd.f32 %v553, %v556
        %vm558 = vweird.f32 %v553
        %v559 = vsel %vm558, %v553, %v557
        %v560 = vmul.f32 %v546, %v559
        %v561 = vmul.f32 %v549, %v559
        %v562 = vmul.f32 %v552, %v559
        %v563 = vadd.f32 %v560, 1.1920929e-07
        %v564 = vadd.f32 %v561, 1.1920929e-07
        %v565 = vadd.f32 %v562, 1.1920929e-07
        %v566 = vrsqrt.pop %v563
        %v567 = vmul.f32 %v566, %v563
        %v568 = vmul.f32 %v567, %v566
        %v569 = vmul.f32 0.5, %v568
        %v570 = vsub.f32 1.5, %v569
        %v571 = vmul.f32 %v566, %v570
        %vm572 = vweird.f32 %v563
        %vm573 = vweird.f32 %v566
        %vm574 = vmor %vm572, %vm573
        %v575 = vsel %vm574, %v566, %v571
        %v576 = vrsqrt.pop %v564
        %v577 = vmul.f32 %v576, %v564
        %v578 = vmul.f32 %v577, %v576
        %v579 = vmul.f32 0.5, %v578
        %v580 = vsub.f32 1.5, %v579
        %v581 = vmul.f32 %v576, %v580
        %vm582 = vweird.f32 %v564
        %vm583 = vweird.f32 %v576
        %vm584 = vmor %vm582, %vm583
        %v585 = vsel %vm584, %v576, %v581
        %v586 = vrsqrt.pop %v565
        %v587 = vmul.f32 %v586, %v565
        %v588 = vmul.f32 %v587, %v586
        %v589 = vmul.f32 0.5, %v588
        %v590 = vsub.f32 1.5, %v589
        %v591 = vmul.f32 %v586, %v590
        %vm592 = vweird.f32 %v565
        %vm593 = vweird.f32 %v586
        %vm594 = vmor %vm592, %vm593
        %v595 = vsel %vm594, %v586, %v591
        %v596 = vmul.f32 %v537, %v575
        %v597 = vmul.f32 %v538, %v585
        %v598 = vmul.f32 %v539, %v595
        %v599 = vpack.c.bf16 %v597, %v596
        %v600 = vpack.c.bf16 %v598, %v598
        %v601 = vld [vmem:[%s2] sm:$0xff]
        %v602 = vld [vmem:[%s2 + $0x8] sm:$0xff]
        %v603 = vld [vmem:[%s2 + $0x10] sm:$0xff]
        %v604 = vld [vmem:[%s2 + $0x18] sm:$0xff]
        %v605 = vld [vmem:[%s2 + $0x20] sm:$0xff]
        %v606 = vld [vmem:[%s2 + $0x28] sm:$0xff]
        %v607 = vld [vmem:[%s2 + $0x30] sm:$0xff]
        %v608 = vld [vmem:[%s2 + $0x38] sm:$0xff]
        %v617 = vunpack.c.l.b16 %v601
        %v618 = vunpack.c.h.b16 %v601
        %v619 = vunpack.c.l.b16 %v602
        %v620 = vunpack.c.h.b16 %v602
        %v621 = vunpack.c.l.b16 %v603
        %v622 = vunpack.c.h.b16 %v603
        %v623 = vunpack.c.l.b16 %v604
        %v624 = vunpack.c.h.b16 %v604
        %v625 = vunpack.c.l.b16 %v605
        %v626 = vunpack.c.h.b16 %v605
        %v627 = vunpack.c.l.b16 %v606
        %v628 = vunpack.c.h.b16 %v606
        %v629 = vunpack.c.l.b16 %v607
        %v630 = vunpack.c.h.b16 %v607
        %v631 = vunpack.c.l.b16 %v608
        %v632 = vunpack.c.h.b16 %v608
        %v633 = vpack.c.b16 %v619, %v617
        %v634 = vpack.c.b16 %v620, %v618
        %v635 = vpack.c.b16 %v623, %v621
        %v636 = vpack.c.b16 %v624, %v622
        %v637 = vpack.c.b16 %v627, %v625
        %v638 = vpack.c.b16 %v628, %v626
        %v639 = vpack.c.b16 %v631, %v629
        %v640 = vpack.c.b16 %v632, %v630
        %v650 = vsel %vm543, %v599, 0
        %v653 = vsel %vm543, %v600, 0
        %655 = vmatpush.bf16.msra.mxu0 0
        %656 = vmatpush.bf16.msra.mxu0 0
        %657 = vmatpush.bf16.msra.mxu0 0
        %658 = vmatpush.bf16.msra.mxu0 0
        %659 = vmatpush.bf16.msra.mxu0 %v639
        %660 = vmatpush.bf16.msra.mxu0 %v637
        %661 = vmatpush.bf16.msra.mxu0 %v635
        %662 = vmatpush.bf16.msra.mxu0 %v633
        %663 = vmatmul.bf16.gmra.mxu0 %v650
        %v664 = vpop.f32.mrf.mxu0
        %v665 = vadd.f32 0.0, %v664
        %v666 = vpop.f32.mrf.mxu0
        %v667 = vadd.f32 0.0, %v666
        %668 = vmatmul.bf16.gmra.mxu0 %v653
        %v669 = vpop.f32.mrf.mxu0
        %v670 = vadd.f32 0.0, %v669
        %v671 = vpop.f32.mrf.mxu0
        %672 = vdwg.mxu0
        %673 = vmatpush.bf16.msra.mxu0 0
        %674 = vmatpush.bf16.msra.mxu0 0
        %675 = vmatpush.bf16.msra.mxu0 0
        %676 = vmatpush.bf16.msra.mxu0 0
        %677 = vmatpush.bf16.msra.mxu0 %v640
        %678 = vmatpush.bf16.msra.mxu0 %v638
        %679 = vmatpush.bf16.msra.mxu0 %v636
        %680 = vmatpush.bf16.msra.mxu0 %v634
        %681 = vmatmul.bf16.gmra.mxu0 %v650
        %v682 = vpop.f32.mrf.mxu0
        %v683 = vadd.f32 0.0, %v682
        %v684 = vpop.f32.mrf.mxu0
        %v685 = vadd.f32 0.0, %v684
        %686 = vmatmul.bf16.gmra.mxu0 %v653
        %v687 = vpop.f32.mrf.mxu0
        %v688 = vadd.f32 0.0, %v687
        %v689 = vpop.f32.mrf.mxu0
        %690 = vdwg.mxu0
        %v691 = vld [vmem:[#allocation12] sm:$0xf]
        %v692 = vld [vmem:[#allocation12 + $0x4] sm:$0xf]
        %v693 = vld [vmem:[#allocation12 + $0x8] sm:$0xf]
        %v694 = vld [vmem:[#allocation12 + $0xc] sm:$0xf]
        %v695 = vld [vmem:[#allocation12 + $0x10] sm:$0xf]
        %v696 = vld [vmem:[#allocation12 + $0x14] sm:$0xf]
        %v697 = vld [vmem:[#allocation12 + $0x18] sm:$0xf]
        %v698 = vld [vmem:[#allocation12 + $0x1c] sm:$0xf]
        %v699 = vld [vmem:[#allocation8] sm:$0xff]
        %v700 = vld [vmem:[#allocation8 + $0x8] sm:$0xff]
        %v701 = vld [vmem:[#allocation8 + $0x10] sm:$0xff]
        %v702 = vld [vmem:[#allocation9] sm:$0xff]
        %v703 = vld [vmem:[#allocation9 + $0x8] sm:$0xff]
        %v704 = vld [vmem:[#allocation9 + $0x10] sm:$0xff]
        %v705 = vld [vmem:[#allocation11] sm:$0xf]
        %v706 = vld [vmem:[#allocation11 + $0x4] sm:$0xf]
        %v707 = vld [vmem:[#allocation11 + $0x8] sm:$0xf]
        %v708 = vld [vmem:[#allocation11 + $0xc] sm:$0xf]
        %v709 = vld [vmem:[#allocation11 + $0x10] sm:$0xf]
        %v710 = vld [vmem:[#allocation11 + $0x14] sm:$0xf]
        %v711 = vld [vmem:[#allocation11 + $0x18] sm:$0xf]
        %v712 = vld [vmem:[#allocation11 + $0x1c] sm:$0xf]
        %v713 = vmul.f32 %v665, %v665
        %v714 = vmul.f32 %v667, %v667
        %v715 = vmul.f32 %v670, %v670
        %v716 = vpack.c.bf16 %v714, %v713
        %v717 = vpack.c.bf16 %v715, %v715
        %v726 = vunpack.c.l.b16 %v691
        %v727 = vunpack.c.l.b16 %v692
        %v728 = vunpack.c.l.b16 %v693
        %v729 = vunpack.c.l.b16 %v694
        %v730 = vunpack.c.l.b16 %v695
        %v731 = vunpack.c.l.b16 %v696
        %v732 = vunpack.c.l.b16 %v697
        %v733 = vunpack.c.l.b16 %v698
        %v734 = vpack.c.b16 %v727, %v726
        %v735 = vpack.c.b16 %v729, %v728
        %v736 = vpack.c.b16 %v731, %v730
        %v737 = vpack.c.b16 %v733, %v732
        %v743 = vsel %vm543, %v716, 0
        %v746 = vsel %vm543, %v717, 0
        %748 = vmatpush.bf16.msra.mxu0 0
        %749 = vmatpush.bf16.msra.mxu0 0
        %750 = vmatpush.bf16.msra.mxu0 0
        %751 = vmatpush.bf16.msra.mxu0 0
        %752 = vmatpush.bf16.msra.mxu0 %v737
        %753 = vmatpush.bf16.msra.mxu0 %v736
        %754 = vmatpush.bf16.msra.mxu0 %v735
        %755 = vmatpush.bf16.msra.mxu0 %v734
        %756 = vmatmul.bf16.gmra.mxu0 %v743
        %v757 = vpop.f32.mrf.mxu0
        %v758 = vadd.f32 1.1920929e-07, %v757
        %v759 = vpop.f32.mrf.mxu0
        %v760 = vadd.f32 1.1920929e-07, %v759
        %761 = vmatmul.bf16.gmra.mxu0 %v746
        %v762 = vpop.f32.mrf.mxu0
        %v763 = vadd.f32 1.1920929e-07, %v762
        %v764 = vpop.f32.mrf.mxu0
        %765 = vdwg.mxu0
        %v766 = vrsqrt.pop %v758
        %v767 = vmul.f32 %v766, %v758
        %v768 = vmul.f32 %v767, %v766
        %v769 = vmul.f32 0.5, %v768
        %v770 = vsub.f32 1.5, %v769
        %v771 = vmul.f32 %v766, %v770
        %vm772 = vweird.f32 %v758
        %vm773 = vweird.f32 %v766
        %vm774 = vmor %vm772, %vm773
        %v775 = vsel %vm774, %v766, %v771
        %v776 = vrsqrt.pop %v760
        %v777 = vmul.f32 %v776, %v760
        %v778 = vmul.f32 %v777, %v776
        %v779 = vmul.f32 0.5, %v778
        %v780 = vsub.f32 1.5, %v779
        %v781 = vmul.f32 %v776, %v780
        %vm782 = vweird.f32 %v760
        %vm783 = vweird.f32 %v776
        %vm784 = vmor %vm782, %vm783
        %v785 = vsel %vm784, %v776, %v781
        %v786 = vrsqrt.pop %v763
        %v787 = vmul.f32 %v786, %v763
        %v788 = vmul.f32 %v787, %v786
        %v789 = vmul.f32 0.5, %v788
        %v790 = vsub.f32 1.5, %v789
        %v791 = vmul.f32 %v786, %v790
        %vm792 = vweird.f32 %v763
        %vm793 = vweird.f32 %v786
        %vm794 = vmor %vm792, %vm793
        %v795 = vsel %vm794, %v786, %v791
        %v796 = vmul.f32 %v775, 0.17677669
        %v797 = vmul.f32 %v785, 0.17677669
        %v798 = vmul.f32 %v795, 0.17677669
        %v799 = vmul.f32 %v665, %v796
        %v800 = vmul.f32 %v667, %v797
        %v801 = vmul.f32 %v670, %v798
        %v802 = vpack.c.bf16 %v800, %v799
        %v803 = vpack.c.bf16 %v801, %v801
        %v812 = vunpack.c.l.b16 %v705
        %v813 = vunpack.c.l.b16 %v706
        %v814 = vunpack.c.l.b16 %v707
        %v815 = vunpack.c.l.b16 %v708
        %v816 = vunpack.c.l.b16 %v709
        %v817 = vunpack.c.l.b16 %v710
        %v818 = vunpack.c.l.b16 %v711
        %v819 = vunpack.c.l.b16 %v712
        %v820 = vpack.c.b16 %v813, %v812
        %v821 = vpack.c.b16 %v815, %v814
        %v822 = vpack.c.b16 %v817, %v816
        %v823 = vpack.c.b16 %v819, %v818
        %v829 = vsel %vm543, %v802, 0
        %v832 = vsel %vm543, %v803, 0
        %834 = vmatpush.bf16.msra.mxu0 0
        %835 = vmatpush.bf16.msra.mxu0 0
        %836 = vmatpush.bf16.msra.mxu0 0
        %837 = vmatpush.bf16.msra.mxu0 0
        %838 = vmatpush.bf16.msra.mxu0 %v823
        %839 = vmatpush.bf16.msra.mxu0 %v822
        %840 = vmatpush.bf16.msra.mxu0 %v821
        %841 = vmatpush.bf16.msra.mxu0 %v820
        %842 = vmatmul.bf16.gmra.mxu0 %v829
        %v843 = vpop.f32.mrf.mxu0
        %v844 = vadd.f32 0.0, %v843
        %v845 = vpop.f32.mrf.mxu0
        %v846 = vadd.f32 0.0, %v845
        %847 = vmatmul.bf16.gmra.mxu0 %v832
        %v848 = vpop.f32.mrf.mxu0
        %v849 = vadd.f32 0.0, %v848
        %v850 = vpop.f32.mrf.mxu0
        %851 = vdwg.mxu0
        %v852 = vmul.f32 %v799, %v699
        %v853 = vmul.f32 %v800, %v700
        %v854 = vmul.f32 %v801, %v701
        %v855 = vmul.f32 %v844, %v702
        %v856 = vmul.f32 %v846, %v703
        %v857 = vmul.f32 %v849, %v704
        %v858 = vadd.f32 %v852, %v855
        %v859 = vadd.f32 %v853, %v856
        %v860 = vadd.f32 %v854, %v857
        %v861 = vpack.c.bf16 %v858, %v858
        %v862 = vpack.c.bf16 %v859, %v859
        %v863 = vpack.c.bf16 %v860, %v860
        %866 = vrot.lane.b32.xlu0 %v716, 64
        %v867 = vpop.permute.xlu0 %866
        %868 = vrot.lane.b32.xlu0 %v717, 64
        %v869 = vpop.permute.xlu0 %868
        %v871 = vsel %vm543, %v867, 0
        %v874 = vsel %vm543, %v869, 0
        %876 = vmatpush.bf16.msra.mxu0 0
        %877 = vmatpush.bf16.msra.mxu0 0
        %878 = vmatpush.bf16.msra.mxu0 0
        %879 = vmatpush.bf16.msra.mxu0 0
        %880 = vmatpush.bf16.msra.mxu0 %v737
        %881 = vmatpush.bf16.msra.mxu0 %v736
        %882 = vmatpush.bf16.msra.mxu0 %v735
        %883 = vmatpush.bf16.msra.mxu0 %v734
        %884 = vmatmul.bf16.gmra.mxu0 %v871
        %v885 = vpop.f32.mrf.mxu0
        %v886 = vadd.f32 1.1920929e-07, %v885
        %v887 = vpop.f32.mrf.mxu0
        %v888 = vadd.f32 1.1920929e-07, %v887
        %889 = vmatmul.bf16.gmra.mxu0 %v874
        %v890 = vpop.f32.mrf.mxu0
        %v891 = vadd.f32 1.1920929e-07, %v890
        %v892 = vpop.f32.mrf.mxu0
        %893 = vdwg.mxu0
        %v894 = vrsqrt.pop %v886
        %v895 = vmul.f32 %v894, %v886
        %v896 = vmul.f32 %v895, %v894
        %v897 = vmul.f32 0.5, %v896
        %v898 = vsub.f32 1.5, %v897
        %v899 = vmul.f32 %v894, %v898
        %vm900 = vweird.f32 %v886
        %vm901 = vweird.f32 %v894
        %vm902 = vmor %vm900, %vm901
        %v903 = vsel %vm902, %v894, %v899
        %v904 = vrsqrt.pop %v888
        %v905 = vmul.f32 %v904, %v888
        %v906 = vmul.f32 %v905, %v904
        %v907 = vmul.f32 0.5, %v906
        %v908 = vsub.f32 1.5, %v907
        %v909 = vmul.f32 %v904, %v908
        %vm910 = vweird.f32 %v888
        %vm911 = vweird.f32 %v904
        %vm912 = vmor %vm910, %vm911
        %v913 = vsel %vm912, %v904, %v909
        %v914 = vrsqrt.pop %v891
        %v915 = vmul.f32 %v914, %v891
        %v916 = vmul.f32 %v915, %v914
        %v917 = vmul.f32 0.5, %v916
        %v918 = vsub.f32 1.5, %v917
        %v919 = vmul.f32 %v914, %v918
        %vm920 = vweird.f32 %v891
        %vm921 = vweird.f32 %v914
        %vm922 = vmor %vm920, %vm921
        %v923 = vsel %vm922, %v914, %v919
        %927 = vrot.lane.b32.xlu0 %v903, 64
        %v928 = vpop.permute.xlu0 %927
        %929 = vrot.lane.b32.xlu0 %v913, 64
        %v930 = vpop.permute.xlu0 %929
        %931 = vrot.lane.b32.xlu0 %v923, 64
        %v932 = vpop.permute.xlu0 %931
        %v936 = vmul.f32 %v665, %v928
        %v937 = vmul.f32 %v667, %v930
        %v938 = vmul.f32 %v670, %v932
        %v939 = vpack.c.bf16 %v937, %v936
        %v940 = vpack.c.bf16 %v938, %v938
        %943 = vrot.lane.b32.xlu0 %v939, 64
        %v944 = vpop.permute.xlu0 %943
        %945 = vrot.lane.b32.xlu0 %v940, 64
        %v946 = vpop.permute.xlu0 %945
        %v948 = vsel %vm543, %v944, 0
        %v951 = vsel %vm543, %v946, 0
        %953 = vmatpush.bf16.msra.mxu0 0
        %954 = vmatpush.bf16.msra.mxu0 0
        %955 = vmatpush.bf16.msra.mxu0 0
        %956 = vmatpush.bf16.msra.mxu0 0
        %957 = vmatpush.bf16.msra.mxu0 %v823
        %958 = vmatpush.bf16.msra.mxu0 %v822
        %959 = vmatpush.bf16.msra.mxu0 %v821
        %960 = vmatpush.bf16.msra.mxu0 %v820
        %961 = vmatmul.bf16.gmra.mxu0 %v948
        %v962 = vpop.f32.mrf.mxu0
        %v963 = vadd.f32 0.0, %v962
        %v964 = vpop.f32.mrf.mxu0
        %v965 = vadd.f32 0.0, %v964
        %966 = vmatmul.bf16.gmra.mxu0 %v951
        %v967 = vpop.f32.mrf.mxu0
        %v968 = vadd.f32 0.0, %v967
        %v969 = vpop.f32.mrf.mxu0
        %970 = vdwg.mxu0
        %974 = vrot.lane.b32.xlu0 %v699, 64
        %v975 = vpop.permute.xlu0 %974
        %976 = vrot.lane.b32.xlu0 %v700, 64
        %v977 = vpop.permute.xlu0 %976
        %978 = vrot.lane.b32.xlu0 %v701, 64
        %v979 = vpop.permute.xlu0 %978
        %v983 = vmul.f32 %v936, %v975
        %v984 = vmul.f32 %v937, %v977
        %v985 = vmul.f32 %v938, %v979
        %v986 = vmul.f32 %v963, %v702
        %v987 = vmul.f32 %v965, %v703
        %v988 = vmul.f32 %v968, %v704
        %992 = vrot.lane.b32.xlu0 %v986, 64
        %v993 = vpop.permute.xlu0 %992
        %994 = vrot.lane.b32.xlu0 %v987, 64
        %v995 = vpop.permute.xlu0 %994
        %996 = vrot.lane.b32.xlu0 %v988, 64
        %v997 = vpop.permute.xlu0 %996
        %v1001 = vadd.f32 %v983, %v993
        %v1002 = vadd.f32 %v984, %v995
        %v1003 = vadd.f32 %v985, %v997
        %v1004 = vpack.c.bf16 %v1001, %v1001
        %v1005 = vpack.c.bf16 %v1002, %v1002
        %v1006 = vpack.c.bf16 %v1003, %v1003
        %v1007 = vpack.c.bf16 %v683, %v683
        %v1008 = vpack.c.bf16 %v685, %v685
        %v1009 = vpack.c.bf16 %v688, %v688
        %v1010 = vld [vmem:[%s11] sm:$0xff]
        %v1011 = vld [vmem:[%s11 + $0x8] sm:$0xff]
        %v1012 = vld [vmem:[%s11 + $0x10] sm:$0xff]
        %v1016 = vunpack.c.l.b16 %v861
        %v1017 = vunpack.c.l.b16 %v862
        %v1018 = vunpack.c.l.b16 %v863
        %v1019 = vpack.c.b16 %v1017, %v1016
        %v1020 = vpack.c.b16 %v1018, %v1018
        %v1024 = vunpack.c.l.b16 %v1004
        %v1025 = vunpack.c.l.b16 %v1005
        %v1026 = vunpack.c.l.b16 %v1006
        %v1027 = vpack.c.b16 %v1025, %v1024
        %v1028 = vpack.c.b16 %v1026, %v1026
        %1029 = vrot.lane.b32.xlu0 %v1027, 64
        %v1030 = vpop.permute.xlu0 %1029
        %1031 = vrot.lane.b32.xlu0 %v1028, 64
        %v1032 = vpop.permute.xlu0 %1031
        %vm1033 = vcmask 261120
        %v1035 = vsel %vm1033, %v1019, 0
        %v1038 = vsel %vm1033, %v1020, 0
        %v1041 = vsel %vm1033, %v1030, 0
        %v1044 = vsel %vm1033, %v1032, 0
        %1046 = vmatpush.bf16.xpose.msra.mxu0 0
        %1047 = vmatpush.bf16.xpose.msra.mxu0 0
        %1048 = vmatpush.bf16.xpose.msra.mxu0 0
        %1049 = vmatpush.bf16.xpose.msra.mxu0 0
        %1050 = vmatpush.bf16.xpose.msra.mxu0 0
        %1051 = vmatpush.bf16.xpose.msra.mxu0 0
        %1052 = vmatpush.bf16.xpose.msra.mxu0 %v1044
        %1053 = vmatpush.bf16.xpose.msra.mxu0 %v1041
        %1054 = vmatmul.bf16.gmra.mxu0 %v1035
        %v1055 = vpop.f32.mrf.mxu0
        %v1056 = vadd.f32 %v1010, %v1055
        %v1057 = vpop.f32.mrf.mxu0
        %v1058 = vadd.f32 %v1011, %v1057
        %1059 = vmatmul.bf16.gmra.mxu0 %v1038
        %v1060 = vpop.f32.mrf.mxu0
        %v1061 = vadd.f32 %v1012, %v1060
        %v1062 = vpop.f32.mrf.mxu0
        %1063 = vdwg.mxu0
        %vm1064 = vcmask 195584
        %v1065 = vsel %vm1064, %v1056, -inf
        %1066 = vmax.xlane.f32.xlu0 %v1065
        %v1067 = vpop.xlane.xlu0 %1066
        %v1068 = vsel %vm1064, %v1058, -inf
        %1069 = vmax.xlane.f32.xlu0 %v1068
        %v1070 = vpop.xlane.xlu0 %1069
        %v1071 = vsel %vm1064, %v1061, -inf
        %1072 = vmax.xlane.f32.xlu0 %v1071
        %v1073 = vpop.xlane.xlu0 %1072
        %v1074 = vsub.f32 %v1056, %v1067
        %v1075 = vsub.f32 %v1058, %v1070
        %v1076 = vsub.f32 %v1061, %v1073
        %v1077 = vmul.f32 %v1074, 1.442695
        %v1078 = vpow.pop %v1077
        %v1079 = vmul.f32 %v1075, 1.442695
        %v1080 = vpow.pop %v1079
        %v1081 = vmul.f32 %v1076, 1.442695
        %v1082 = vpow.pop %v1081
        %v1083 = vsel %vm1064, %v1078, 0.0
        %1084 = vadd.xlane.f32.xlu0 %v1083
        %v1085 = vpop.xlane.xlu0 %1084
        %v1086 = vsel %vm1064, %v1080, 0.0
        %1087 = vadd.xlane.f32.xlu0 %v1086
        %v1088 = vpop.xlane.xlu0 %1087
        %v1089 = vsel %vm1064, %v1082, 0.0
        %1090 = vadd.xlane.f32.xlu0 %v1089
        %v1091 = vpop.xlane.xlu0 %1090
        %v1092 = vrcp.pop %v1085
        %v1093 = vrcp.pop %v1088
        %v1094 = vrcp.pop %v1091
        %v1095 = vmul.f32 %v1078, %v1092
        %v1096 = vmul.f32 %v1080, %v1093
        %v1097 = vmul.f32 %v1082, %v1094
        %v1098 = vpack.c.bf16 %v1096, %v1095
        %v1099 = vpack.c.bf16 %v1097, %v1097
        %v1103 = vunpack.c.l.b16 %v1007
        %v1104 = vunpack.c.l.b16 %v1008
        %v1105 = vunpack.c.l.b16 %v1009
        %v1106 = vpack.c.b16 %v1104, %v1103
        %v1107 = vpack.c.b16 %v1105, %v1105
        %v1110 = vsel %vm1064, %v1098, 0
        %v1113 = vsel %vm1064, %v1099, 0
        %vm1115 = vcmask 1043456
        %v1117 = vsel %vm1115, %v1107, 0
        %1119 = vmatpush.bf16.msra.mxu0 0
        %1120 = vmatpush.bf16.msra.mxu0 0
        %1121 = vmatpush.bf16.msra.mxu0 0
        %1122 = vmatpush.bf16.msra.mxu0 0
        %1123 = vmatpush.bf16.msra.mxu0 0
        %1124 = vmatpush.bf16.msra.mxu0 0
        %1125 = vmatpush.bf16.msra.mxu0 %v1117
        %1126 = vmatpush.bf16.msra.mxu0 %v1106
        %1127 = vmatmul.bf16.gmra.mxu0 %v1110
        %v1128 = vpop.f32.mrf.mxu0
        %v1129 = vadd.f32 0.0, %v1128
        %v1130 = vpop.f32.mrf.mxu0
        %v1131 = vadd.f32 0.0, %v1130
        %1132 = vmatmul.bf16.gmra.mxu0 %v1113
        %v1133 = vpop.f32.mrf.mxu0
        %v1134 = vadd.f32 0.0, %v1133
        %v1135 = vpop.f32.mrf.mxu0
        %1136 = vdwg.mxu0
        %v1137 = vpack.c.bf16 %v1131, %v1129
        %v1138 = vpack.c.bf16 %v1134, %v1134
        %v1139 = vld [vmem:[%s3] sm:$0xf]
        %v1140 = vld [vmem:[%s3 + $0x4] sm:$0xf]
        %v1141 = vld [vmem:[%s3 + $0x8] sm:$0xf]
        %v1142 = vld [vmem:[%s3 + $0xc] sm:$0xf]
        %1143 = vrot.lane.b32.xlu0 %v1019, 96
        %v1144 = vpop.permute.xlu0 %1143
        %1145 = vrot.lane.b32.xlu0 %v1020, 96
        %v1146 = vpop.permute.xlu0 %1145
        %1147 = vrot.lane.b32.xlu0 %v1027, 32
        %v1148 = vpop.permute.xlu0 %1147
        %1149 = vrot.lane.b32.xlu0 %v1028, 32
        %v1150 = vpop.permute.xlu0 %1149
        %v1152 = vsel %vm1033, %v1144, 0
        %v1155 = vsel %vm1033, %v1146, 0
        %v1158 = vsel %vm1033, %v1148, 0
        %v1161 = vsel %vm1033, %v1150, 0
        %1163 = vmatpush.bf16.xpose.msra.mxu0 0
        %1164 = vmatpush.bf16.xpose.msra.mxu0 0
        %1165 = vmatpush.bf16.xpose.msra.mxu0 0
        %1166 = vmatpush.bf16.xpose.msra.mxu0 0
        %1167 = vmatpush.bf16.xpose.msra.mxu0 0
        %1168 = vmatpush.bf16.xpose.msra.mxu0 0
        %1169 = vmatpush.bf16.xpose.msra.mxu0 %v1161
        %1170 = vmatpush.bf16.xpose.msra.mxu0 %v1158
        %1171 = vmatmul.bf16.gmra.mxu0 %v1152
        %v1172 = vpop.f32.mrf.mxu0
        %v1173 = vadd.f32 %v1010, %v1172
        %v1174 = vpop.f32.mrf.mxu0
        %v1175 = vadd.f32 %v1011, %v1174
        %1176 = vmatmul.bf16.gmra.mxu0 %v1155
        %v1177 = vpop.f32.mrf.mxu0
        %v1178 = vadd.f32 %v1012, %v1177
        %v1179 = vpop.f32.mrf.mxu0
        %1180 = vdwg.mxu0
        %v1181 = vsel %vm1064, %v1173, -inf
        %1182 = vmax.xlane.f32.xlu0 %v1181
        %v1183 = vpop.xlane.xlu0 %1182
        %v1184 = vsel %vm1064, %v1175, -inf
        %1185 = vmax.xlane.f32.xlu0 %v1184
        %v1186 = vpop.xlane.xlu0 %1185
        %v1187 = vsel %vm1064, %v1178, -inf
        %1188 = vmax.xlane.f32.xlu0 %v1187
        %v1189 = vpop.xlane.xlu0 %1188
        %v1190 = vsub.f32 %v1173, %v1183
        %v1191 = vsub.f32 %v1175, %v1186
        %v1192 = vsub.f32 %v1178, %v1189
        %v1193 = vmul.f32 %v1190, 1.442695
        %v1194 = vpow.pop %v1193
        %v1195 = vmul.f32 %v1191, 1.442695
        %v1196 = vpow.pop %v1195
        %v1197 = vmul.f32 %v1192, 1.442695
        %v1198 = vpow.pop %v1197
        %v1199 = vsel %vm1064, %v1194, 0.0
        %1200 = vadd.xlane.f32.xlu0 %v1199
        %v1201 = vpop.xlane.xlu0 %1200
        %v1202 = vsel %vm1064, %v1196, 0.0
        %1203 = vadd.xlane.f32.xlu0 %v1202
        %v1204 = vpop.xlane.xlu0 %1203
        %v1205 = vsel %vm1064, %v1198, 0.0
        %1206 = vadd.xlane.f32.xlu0 %v1205
        %v1207 = vpop.xlane.xlu0 %1206
        %v1208 = vrcp.pop %v1201
        %v1209 = vrcp.pop %v1204
        %v1210 = vrcp.pop %v1207
        %v1211 = vmul.f32 %v1194, %v1208
        %v1212 = vmul.f32 %v1196, %v1209
        %v1213 = vmul.f32 %v1198, %v1210
        %v1214 = vpack.c.bf16 %v1212, %v1211
        %v1215 = vpack.c.bf16 %v1213, %v1213
        %1216 = vrot.lane.b32.xlu0 %v1106, 96
        %v1217 = vpop.permute.xlu0 %1216
        %1218 = vrot.lane.b32.xlu0 %v1107, 96
        %v1219 = vpop.permute.xlu0 %1218
        %v1222 = vsel %vm1064, %v1214, 0
        %v1225 = vsel %vm1064, %v1215, 0
        %v1228 = vsel %vm1115, %v1219, 0
        %1230 = vmatpush.bf16.msra.mxu0 0
        %1231 = vmatpush.bf16.msra.mxu0 0
        %1232 = vmatpush.bf16.msra.mxu0 0
        %1233 = vmatpush.bf16.msra.mxu0 0
        %1234 = vmatpush.bf16.msra.mxu0 0
        %1235 = vmatpush.bf16.msra.mxu0 0
        %1236 = vmatpush.bf16.msra.mxu0 %v1228
        %1237 = vmatpush.bf16.msra.mxu0 %v1217
        %1238 = vmatmul.bf16.gmra.mxu0 %v1222
        %v1239 = vpop.f32.mrf.mxu0
        %v1240 = vadd.f32 0.0, %v1239
        %v1241 = vpop.f32.mrf.mxu0
        %v1242 = vadd.f32 0.0, %v1241
        %1243 = vmatmul.bf16.gmra.mxu0 %v1225
        %v1244 = vpop.f32.mrf.mxu0
        %v1245 = vadd.f32 0.0, %v1244
        %v1246 = vpop.f32.mrf.mxu0
        %1247 = vdwg.mxu0
        %v1248 = vpack.c.bf16 %v1242, %v1240
        %v1249 = vpack.c.bf16 %v1245, %v1245
        %v1250 = vld [vmem:[%s3 + $0x10] sm:$0xf]
        %v1251 = vld [vmem:[%s3 + $0x14] sm:$0xf]
        %v1252 = vld [vmem:[%s3 + $0x18] sm:$0xf]
        %v1253 = vld [vmem:[%s3 + $0x1c] sm:$0xf]
        %v1258 = vunpack.c.l.b16 %v1250
        %v1259 = vunpack.c.l.b16 %v1251
        %v1260 = vunpack.c.l.b16 %v1252
        %v1261 = vunpack.c.l.b16 %v1253
        %v1262 = vpack.c.b16 %v1259, %v1258
        %v1263 = vpack.c.b16 %v1261, %v1260
        %v1267 = vsel %vm1033, %v1248, 0
        %v1270 = vsel %vm1033, %v1249, 0
        %1272 = vmatpush.bf16.msra.mxu0 0
        %1273 = vmatpush.bf16.msra.mxu0 0
        %1274 = vmatpush.bf16.msra.mxu0 0
        %1275 = vmatpush.bf16.msra.mxu0 0
        %1276 = vmatpush.bf16.msra.mxu0 0
        %1277 = vmatpush.bf16.msra.mxu0 0
        %1278 = vmatpush.bf16.msra.mxu0 %v1263
        %1279 = vmatpush.bf16.msra.mxu0 %v1262
        %1280 = vmatmul.bf16.gmra.mxu0 %v1267
        %v1281 = vpop.f32.mrf.mxu0
        %v1282 = vadd.f32 0.0, %v1281
        %v1283 = vpop.f32.mrf.mxu0
        %v1284 = vadd.f32 0.0, %v1283
        %1285 = vmatmul.bf16.gmra.mxu0 %v1270
        %v1286 = vpop.f32.mrf.mxu0
        %v1287 = vadd.f32 0.0, %v1286
        %v1288 = vpop.f32.mrf.mxu0
        %1289 = vdwg.mxu0
        %v1294 = vunpack.c.l.b16 %v1139
        %v1295 = vunpack.c.l.b16 %v1140
        %v1296 = vunpack.c.l.b16 %v1141
        %v1297 = vunpack.c.l.b16 %v1142
        %v1298 = vpack.c.b16 %v1295, %v1294
        %v1299 = vpack.c.b16 %v1297, %v1296
        %v1303 = vsel %vm1033, %v1137, 0
        %v1306 = vsel %vm1033, %v1138, 0
        %1308 = vmatpush.bf16.msra.mxu0 0
        %1309 = vmatpush.bf16.msra.mxu0 0
        %1310 = vmatpush.bf16.msra.mxu0 0
        %1311 = vmatpush.bf16.msra.mxu0 0
        %1312 = vmatpush.bf16.msra.mxu0 0
        %1313 = vmatpush.bf16.msra.mxu0 0
        %1314 = vmatpush.bf16.msra.mxu0 %v1299
        %1315 = vmatpush.bf16.msra.mxu0 %v1298
        %1316 = vmatmul.bf16.gmra.mxu0 %v1303
        %v1317 = vpop.f32.mrf.mxu0
        %v1318 = vadd.f32 %v1282, %v1317
        %v1319 = vpop.f32.mrf.mxu0
        %v1320 = vadd.f32 %v1284, %v1319
        %1321 = vmatmul.bf16.gmra.mxu0 %v1306
        %v1322 = vpop.f32.mrf.mxu0
        %v1323 = vadd.f32 %v1287, %v1322
        %v1324 = vpop.f32.mrf.mxu0
        %1325 = vdwg.mxu0
        %v1326 = vadd.f32 %v537, %v1318
        %v1327 = vadd.f32 %v538, %v1320
        %v1328 = vadd.f32 %v539, %v1323
        %1329 = vst.msk [vmem:[#allocation2] sm:$0xff] %vm543, %v1326
        %1330 = vst.msk [vmem:[#allocation2 + $0x8] sm:$0xff] %vm543, %v1327
        %1331 = vst.msk [vmem:[#allocation2 + $0x10] sm:$0xff] %vm543, %v1328
        %v1332 = vld [vmem:[%s458] sm:$0xff]
        %v1333 = vpack.c.bf16 %v1332, %v1332
        %v1334 = vld [vmem:[#allocation6] sm:$0xf]
        %v1335 = vld [vmem:[#allocation6 + $0x4] sm:$0xf]
        %v1336 = vld [vmem:[#allocation6 + $0x8] sm:$0xf]
        %v1337 = vld [vmem:[#allocation6 + $0xc] sm:$0xf]
        %v1338 = vld [vmem:[#allocation6 + $0x10] sm:$0xf]
        %v1339 = vld [vmem:[#allocation6 + $0x14] sm:$0xf]
        %v1340 = vld [vmem:[#allocation6 + $0x18] sm:$0xf]
        %v1341 = vld [vmem:[#allocation6 + $0x1c] sm:$0xf]
        %v1342 = vld [vmem:[#allocation2] ss:$3 sm:$0xff]
        %v1343 = vpack.c.bf16 %v1342, %v1342
        %v1344 = vld [vmem:[%s4] sm:$0xf]
        %v1345 = vld [vmem:[%s4 + $0x4] sm:$0xf]
        %v1346 = vld [vmem:[%s4 + $0x8] sm:$0xf]
        %v1347 = vld [vmem:[%s4 + $0xc] sm:$0xf]
        %v1348 = vld [vmem:[%s4 + $0x10] sm:$0xf]
        %v1349 = vld [vmem:[%s4 + $0x14] sm:$0xf]
        %v1350 = vld [vmem:[%s4 + $0x18] sm:$0xf]
        %v1351 = vld [vmem:[%s4 + $0x1c] sm:$0xf]
        %v1360 = vunpack.c.l.b16 %v1344
        %v1361 = vunpack.c.l.b16 %v1345
        %v1362 = vunpack.c.l.b16 %v1346
        %v1363 = vunpack.c.l.b16 %v1347
        %v1364 = vunpack.c.l.b16 %v1348
        %v1365 = vunpack.c.l.b16 %v1349
        %v1366 = vunpack.c.l.b16 %v1350
        %v1367 = vunpack.c.l.b16 %v1351
        %v1368 = vpack.c.b16 %v1361, %v1360
        %v1369 = vpack.c.b16 %v1363, %v1362
        %v1370 = vpack.c.b16 %v1365, %v1364
        %v1371 = vpack.c.b16 %v1367, %v1366
        %v1377 = vsel %vm543, %v1343, 0
        %1379 = vmatpush.bf16.msra.mxu0 0
        %1380 = vmatpush.bf16.msra.mxu0 0
        %1381 = vmatpush.bf16.msra.mxu0 0
        %1382 = vmatpush.bf16.msra.mxu0 0
        %1383 = vmatpush.bf16.msra.mxu0 %v1371
        %1384 = vmatpush.bf16.msra.mxu0 %v1370
        %1385 = vmatpush.bf16.msra.mxu0 %v1369
        %1386 = vmatpush.bf16.msra.mxu0 %v1368
        %1387 = vmatmul.bf16.gmra.mxu0 %v1377
        %v1388 = vpop.f32.mrf.mxu0
        %v1389 = vadd.f32 0.0, %v1388
        %v1390 = vpop.f32.mrf.mxu0
        %1391 = vdwg.mxu0
        %v1400 = vunpack.c.l.b16 %v1334
        %v1401 = vunpack.c.l.b16 %v1335
        %v1402 = vunpack.c.l.b16 %v1336
        %v1403 = vunpack.c.l.b16 %v1337
        %v1404 = vunpack.c.l.b16 %v1338
        %v1405 = vunpack.c.l.b16 %v1339
        %v1406 = vunpack.c.l.b16 %v1340
        %v1407 = vunpack.c.l.b16 %v1341
        %v1408 = vpack.c.b16 %v1401, %v1400
        %v1409 = vpack.c.b16 %v1403, %v1402
        %v1410 = vpack.c.b16 %v1405, %v1404
        %v1411 = vpack.c.b16 %v1407, %v1406
        %v1417 = vsel %vm543, %v1333, 0
        %1419 = vmatpush.bf16.msra.mxu0 0
        %1420 = vmatpush.bf16.msra.mxu0 0
        %1421 = vmatpush.bf16.msra.mxu0 0
        %1422 = vmatpush.bf16.msra.mxu0 0
        %1423 = vmatpush.bf16.msra.mxu0 %v1411
        %1424 = vmatpush.bf16.msra.mxu0 %v1410
        %1425 = vmatpush.bf16.msra.mxu0 %v1409
        %1426 = vmatpush.bf16.msra.mxu0 %v1408
        %1427 = vmatmul.bf16.gmra.mxu0 %v1417
        %v1428 = vpop.f32.mrf.mxu0
        %v1429 = vadd.f32 %v1389, %v1428
        %v1430 = vpop.f32.mrf.mxu0
        %1431 = vdwg.mxu0
        %s1432 = scalar_lea.vmem [#allocation2], 1
        %v1433 = vld [vmem:[%s1432] ss:$3 sm:$0xff]
        %v1434 = vpack.c.bf16 %v1433, %v1433
        %v1435 = vld [vmem:[%s4 + $0x20] sm:$0xf]
        %v1436 = vld [vmem:[%s4 + $0x24] sm:$0xf]
        %v1437 = vld [vmem:[%s4 + $0x28] sm:$0xf]
        %v1438 = vld [vmem:[%s4 + $0x2c] sm:$0xf]
        %v1439 = vld [vmem:[%s4 + $0x30] sm:$0xf]
        %v1440 = vld [vmem:[%s4 + $0x34] sm:$0xf]
        %v1441 = vld [vmem:[%s4 + $0x38] sm:$0xf]
        %v1442 = vld [vmem:[%s4 + $0x3c] sm:$0xf]
        %v1451 = vunpack.c.l.b16 %v1435
        %v1452 = vunpack.c.l.b16 %v1436
        %v1453 = vunpack.c.l.b16 %v1437
        %v1454 = vunpack.c.l.b16 %v1438
        %v1455 = vunpack.c.l.b16 %v1439
        %v1456 = vunpack.c.l.b16 %v1440
        %v1457 = vunpack.c.l.b16 %v1441
        %v1458 = vunpack.c.l.b16 %v1442
        %v1459 = vpack.c.b16 %v1452, %v1451
        %v1460 = vpack.c.b16 %v1454, %v1453
        %v1461 = vpack.c.b16 %v1456, %v1455
        %v1462 = vpack.c.b16 %v1458, %v1457
        %v1468 = vsel %vm543, %v1434, 0
        %1470 = vmatpush.bf16.msra.mxu0 0
        %1471 = vmatpush.bf16.msra.mxu0 0
        %1472 = vmatpush.bf16.msra.mxu0 0
        %1473 = vmatpush.bf16.msra.mxu0 0
        %1474 = vmatpush.bf16.msra.mxu0 %v1462
        %1475 = vmatpush.bf16.msra.mxu0 %v1461
        %1476 = vmatpush.bf16.msra.mxu0 %v1460
        %1477 = vmatpush.bf16.msra.mxu0 %v1459
        %1478 = vmatmul.bf16.gmra.mxu0 %v1468
        %v1479 = vpop.f32.mrf.mxu0
        %v1480 = vadd.f32 0.0, %v1479
        %v1481 = vpop.f32.mrf.mxu0
        %1482 = vdwg.mxu0
        %v1483 = vadd.f32 %v1429, %v1480
        %s1484 = scalar_lea.vmem [#allocation2], 2
        %v1485 = vld [vmem:[%s1484] ss:$3 sm:$0xff]
        %v1486 = vpack.c.bf16 %v1485, %v1485
        %v1487 = vld [vmem:[%s4 + $0x40] sm:$0xf]
        %v1488 = vld [vmem:[%s4 + $0x44] sm:$0xf]
        %v1489 = vld [vmem:[%s4 + $0x48] sm:$0xf]
        %v1490 = vld [vmem:[%s4 + $0x4c] sm:$0xf]
        %v1491 = vld [vmem:[%s4 + $0x50] sm:$0xf]
        %v1492 = vld [vmem:[%s4 + $0x54] sm:$0xf]
        %v1493 = vld [vmem:[%s4 + $0x58] sm:$0xf]
        %v1494 = vld [vmem:[%s4 + $0x5c] sm:$0xf]
        %v1503 = vunpack.c.l.b16 %v1487
        %v1504 = vunpack.c.l.b16 %v1488
        %v1505 = vunpack.c.l.b16 %v1489
        %v1506 = vunpack.c.l.b16 %v1490
        %v1507 = vunpack.c.l.b16 %v1491
        %v1508 = vunpack.c.l.b16 %v1492
        %v1509 = vunpack.c.l.b16 %v1493
        %v1510 = vunpack.c.l.b16 %v1494
        %v1511 = vpack.c.b16 %v1504, %v1503
        %v1512 = vpack.c.b16 %v1506, %v1505
        %v1513 = vpack.c.b16 %v1508, %v1507
        %v1514 = vpack.c.b16 %v1510, %v1509
        %v1520 = vsel %vm543, %v1486, 0
        %1522 = vmatpush.bf16.msra.mxu0 0
        %1523 = vmatpush.bf16.msra.mxu0 0
        %1524 = vmatpush.bf16.msra.mxu0 0
        %1525 = vmatpush.bf16.msra.mxu0 0
        %1526 = vmatpush.bf16.msra.mxu0 %v1514
        %1527 = vmatpush.bf16.msra.mxu0 %v1513
        %1528 = vmatpush.bf16.msra.mxu0 %v1512
        %1529 = vmatpush.bf16.msra.mxu0 %v1511
        %1530 = vmatmul.bf16.gmra.mxu0 %v1520
        %v1531 = vpop.f32.mrf.mxu0
        %v1532 = vadd.f32 0.0, %v1531
        %v1533 = vpop.f32.mrf.mxu0
        %1534 = vdwg.mxu0
        %v1535 = vadd.f32 %v1483, %v1532
        %v1536 = vld [vmem:[%s6] sm:$0x1]
        %v1538 = vperm.slane %v1536, 0
        %v1540 = vadd.f32 %v1535, %v1538
        %1541 = vst.msk [vmem:[%s529] sm:$0xff] %vm543, %v1540
        %s1542 = sand.u32 %s302, 1
        %s1543 = scalar_lea.sflag [#allocation5], %s1542
        %s1544 = sand.u32 %s302, 1
        %s1545 = smul.addr %s1544, 8
        %s1546 = scalar_lea.vmem [#allocation14], %s1545
        // Predicated region
        $region93: #{tpu_custom_call.1} parent=67 // pred_check
          %p1547 = pneg %p312
        $region94: #{tpu_custom_call.1} parent=67 // pred_check_branch
          %1549 = sbr.rel (%p1547) target = $region96
        $region95: #{tpu_custom_call.1} parent=67 // pred_region
          %1551 = vsyncadd %s1543, 0
          %s1552 = smul.addr %s32, 8
          %s1553 = scalar_lea.hbm %s12, %s1552
          %s1555 = sshll.u32 %s1546, 4
          %s1556 = int_to_ptr.vmem [resolvable:$true] %s1555
          %s1557 = sshll.u32 %s1553, 4
          %s1558 = int_to_ptr.hbm [resolvable:$true] %s1557
          %1560 = dma.vmem_to_hbm [thread:$0]  %s1556, 128, %s1558, %s1543
        $region96: #{tpu_custom_call.1} parent=67 // pred_fallthru
          _
      $region68: #{tpu_custom_call.1} parent=5 // pred_fallthru
        _
      %p1561 = scmp.le.s32.totalorder 2, %s27
      // Predicated region
      $region97: #{tpu_custom_call.1} parent=5 // pred_check
        %p1562 = pneg %p1561
      $region98: #{tpu_custom_call.1} parent=5 // pred_check_branch
        %1564 = sbr.rel (%p1562) target = $region100
      $region99: #{tpu_custom_call.1} parent=5 // pred_region
        %s1565 = ssub.s32 %s27, 2
        // Predicated region
        $region101: #{tpu_custom_call.1} parent=99 // pred_check
          %p1566 = pneg %p318
        $region102: #{tpu_custom_call.1} parent=99 // pred_check_branch
          %1568 = sbr.rel (%p1566) target = $region104
        $region103: #{tpu_custom_call.1} parent=99 // pred_region
          %s1569 = sand.u32 %s303, 1
          %s1570 = scalar_lea.sflag [#allocation5], %s1569
          %s1571 = sand.u32 %s303, 1
          %s1572 = smul.addr %s1571, 8
          %s1573 = scalar_lea.vmem [#allocation14], %s1572
          %1575 = dma.done %s1570, 128
        $region104: #{tpu_custom_call.1} parent=99 // pred_fallthru
          _
      $region100: #{tpu_custom_call.1} parent=5 // pred_fallthru
        _
    $region6: #{tpu_custom_call.1} parent=1 // loop_footer
      %s31 = sadd.s32 1, %s27
    $region7: #{tpu_custom_call.1} parent=1 // loop_footer_branch
      %26 = sbr.rel target = $region3
    $region8: #{tpu_custom_call.1} parent=1 // loop_exit
      _
    %1576 = vsyncpa [#allocation4], 1
    %s1577 = scalar_lea.sflag [#allocation4], 1
    %1578 = vsyncpa %s1577, 1
    %1579 = vsyncpa [#allocation7], 1
    %1580 = vsyncpa [#allocation10], 1
    %1581 = vsyncpa [#allocation13], 1
    %1582 = vsyncpa [#allocation5], 1
    %s1583 = scalar_lea.sflag [#allocation5], 1
    %1584 = vsyncpa %s1583, 1

</llo_original>
